<compile_context>
chip_gen: v7x
topology: tpu7x:2x2x1
jax: 0.10.0
libtpu: 0.0.40
codegen_flags: <defaults>
</compile_context>

<pallas_src>
import functools

import jax
import jax.numpy as jnp
from jax import lax
from jax.experimental import pallas as pl
from jax.experimental.pallas import tpu as pltpu


def _round_up(x, m):
    return (x + m - 1) // m * m


def _conv_stats_kernel(x_ref, w_ref, o_ref, sum_ref, ssq_ref, *,
                       kh_size, kw_size, h_out, w_out):
    # x_ref:   (1, Hp, Wp, Cin)        zero-padded input image (bf16)
    # w_ref:   (KH*KW*Cin, Cout_pad)   im2col-ordered weights (bf16)
    # o_ref:   (1, Hout*Wout, Cout_pad) f32 conv output (lane-dense)
    # sum_ref: (1, 1, Cout_pad)        per-image channel sum of conv output
    # ssq_ref: (1, 1, Cout_pad)        per-image channel sum of squares
    x = x_ref[0].astype(jnp.float32)                      # (Hp, Wp, Cin)
    cin = x.shape[-1]
    hw = h_out * w_out

    # im2col in VMEM: (Hout*Wout, KH*KW*Cin), column order (kh, kw, cin).
    taps = []
    for kh in range(kh_size):
        for kw in range(kw_size):
            taps.append(x[kh:kh + h_out, kw:kw + w_out, :].reshape(hw, cin))
    patches = jnp.concatenate(taps, axis=-1)              # (HW, KH*KW*Cin) f32

    # Single fused MXU matmul, bf16 inputs, f32 accumulation.
    conv = jnp.dot(patches.astype(jnp.bfloat16), w_ref[...],
                   preferred_element_type=jnp.float32)    # (HW, Cout_pad) f32

    o_ref[...] = conv[None]
    sum_ref[...] = jnp.sum(conv, axis=0, keepdims=True)[None]
    ssq_ref[...] = jnp.sum(conv * conv, axis=0, keepdims=True)[None]


def _bn_relu_kernel(x_ref, scale_ref, bias_ref, o_ref, *, apply_relu):
    # x_ref / o_ref: (1, row_tile, Cout_pad) f32; scale/bias: (1, 1, Cout_pad) f32
    y = x_ref[...] * scale_ref[...] + bias_ref[...]
    if apply_relu:
        y = jnp.maximum(y, 0.0)
    o_ref[...] = y


def basic_conv(x_nchw, weight_oihw, gamma, beta, *, stride=1, padding=0,
               dilation=1, groups=1, relu=True, bn=True, eps=1e-5,
               compute_dtype=jnp.bfloat16):
    """Forward pass of BasicConv.  Input/output are NCHW float32."""
    # TODO(synk): only stride=1, dilation=1, groups=1 are implemented in the Pallas kernel.
    assert stride == 1 and dilation == 1 and groups == 1

    N, Cin, H, W = x_nchw.shape
    Cout, Cin_w, KH, KW = weight_oihw.shape
    assert Cin_w == Cin
    Hout = H + 2 * padding - KH + 1
    Wout = W + 2 * padding - KW + 1
    Hp, Wp = H + 2 * padding, W + 2 * padding
    HW = Hout * Wout
    Cp = _round_up(Cout, 128)            # lane-dense channel dim
    Kdim = KH * KW * Cin

    # ---- glue: layout change, zero pad, low-precision matmul inputs ----------
    # TODO(synk): for large H/W on v7x (64 MiB VMEM) add a row-tiled grid with a
    # (KH-1)-row halo instead of one whole image per grid step.
    x = jnp.transpose(x_nchw, (0, 2, 3, 1))                           # NHWC
    x = jnp.pad(x, ((0, 0), (padding, padding), (padding, padding), (0, 0)))
    x = x.astype(compute_dtype)
    w = jnp.transpose(weight_oihw, (2, 3, 1, 0)).reshape(Kdim, Cout)  # im2col order
    w = jnp.pad(w, ((0, 0), (0, Cp - Cout))).astype(compute_dtype)

    conv_kernel = functools.partial(
        _conv_stats_kernel, kh_size=KH, kw_size=KW, h_out=Hout, w_out=Wout)

    conv_flops = 2 * N * HW * Kdim * Cp
    conv_bytes = (N * Hp * Wp * Cin * x.dtype.itemsize
                  + Kdim * Cp * w.dtype.itemsize
                  + N * HW * Cp * 4 + 2 * N * Cp * 4)

    conv_out, csum, cssq = pl.pallas_call(
        conv_kernel,
        out_shape=(jax.ShapeDtypeStruct((N, HW, Cp), jnp.float32),
                   jax.ShapeDtypeStruct((N, 1, Cp), jnp.float32),
                   jax.ShapeDtypeStruct((N, 1, Cp), jnp.float32)),
        grid_spec=pltpu.PrefetchScalarGridSpec(
            num_scalar_prefetch=0,
            grid=(N,),
            in_specs=[
                pl.BlockSpec((1, Hp, Wp, Cin), lambda n: (n, 0, 0, 0)),
                pl.BlockSpec((Kdim, Cp), lambda n: (0, 0)),
            ],
            out_specs=(
                pl.BlockSpec((1, HW, Cp), lambda n: (n, 0, 0)),
                pl.BlockSpec((1, 1, Cp), lambda n: (n, 0, 0)),
                pl.BlockSpec((1, 1, Cp), lambda n: (n, 0, 0)),
            )),
        compiler_params=pltpu.CompilerParams(
            dimension_semantics=("parallel",),
            vmem_limit_bytes=48 * 1024 * 1024),
        cost_estimate=pl.CostEstimate(
            flops=conv_flops, transcendentals=0, bytes_accessed=conv_bytes),
    )(x, w)

    # BatchNorm2d in training mode: batch statistics over (N, H, W), biased variance.
    if bn:
        count = N * HW
        mean = jnp.sum(csum, axis=(0, 1)) / count                   # (Cp,)
        var = jnp.sum(cssq, axis=(0, 1)) / count - mean * mean      # biased variance
        var = jnp.maximum(var, 0.0)                                 # guard cancellation
        gamma_p = jnp.pad(gamma.astype(jnp.float32), (0, Cp - Cout))
        beta_p = jnp.pad(beta.astype(jnp.float32), (0, Cp - Cout))
        scale = gamma_p * lax.rsqrt(var + eps)
        bias = beta_p - mean * scale
    else:
        scale = jnp.ones((Cp,), jnp.float32)
        bias = jnp.zeros((Cp,), jnp.float32)

    scale3 = scale.reshape(1, 1, Cp)
    bias3 = bias.reshape(1, 1, Cp)

    # Row tile for the elementwise pass: largest 8-aligned divisor of HW (capped).
    tr = HW
    for cand in (2048, 1024, 512, 256, 128, 64, 32, 16, 8):
        if cand <= HW and HW % cand == 0:
            tr = cand
            break

    bn_bytes = 2 * N * HW * Cp * 4 + 2 * Cp * 4
    y = pl.pallas_call(
        functools.partial(_bn_relu_kernel, apply_relu=relu),
        out_shape=jax.ShapeDtypeStruct((N, HW, Cp), jnp.float32),
        grid_spec=pltpu.PrefetchScalarGridSpec(
            num_scalar_prefetch=0,
            grid=(N, HW // tr),
            in_specs=[
                pl.BlockSpec((1, tr, Cp), lambda n, r: (n, r, 0)),
                pl.BlockSpec((1, 1, Cp), lambda n, r: (0, 0, 0)),
                pl.BlockSpec((1, 1, Cp), lambda n, r: (0, 0, 0)),
            ],
            out_specs=pl.BlockSpec((1, tr, Cp), lambda n, r: (n, r, 0))),
        compiler_params=pltpu.CompilerParams(
            dimension_semantics=("parallel", "parallel"),
            vmem_limit_bytes=48 * 1024 * 1024),
        cost_estimate=pl.CostEstimate(
            flops=3 * N * HW * Cp, transcendentals=0, bytes_accessed=bn_bytes),
        input_output_aliases={0: 0},        # BN+ReLU in place on the conv buffer
    )(conv_out, scale3, bias3)

    y = y.reshape(N, Hout, Wout, Cp)[..., :Cout]
    return jnp.transpose(y, (0, 3, 1, 2))   # back to NCHW


if __name__ == "__main__":
    key = jax.random.PRNGKey(0)
    k1, k2, k3, k4 = jax.random.split(key, 4)

    # BasicConv(in_planes=4, out_planes=8, kernel_size=3, padding=1) at small shapes.
    N, Cin, H, W = 2, 4, 16, 16
    Cout, K = 8, 3
    padding = 1

    x = jax.random.normal(k1, (N, Cin, H, W), jnp.float32)
    fan_in = Cin * K * K
    weight = jax.random.normal(k2, (Cout, Cin, K, K), jnp.float32) / jnp.sqrt(fan_in)
    gamma = 1.0 + 0.1 * jax.random.normal(k3, (Cout,), jnp.float32)
    beta = 0.1 * jax.random.normal(k4, (Cout,), jnp.float32)

    out = basic_conv(x, weight, gamma, beta, stride=1, padding=padding,
                     dilation=1, groups=1, relu=True, bn=True)
    out = jax.block_until_ready(out)

    # Pure-JAX reference: Conv2d(bias=False) + training-mode BatchNorm2d + ReLU.
    # The kernel feeds the MXU with bf16-rounded inputs (f32 accumulation), which is
    # the standard TPU matmul path, so the reference uses the same bf16-rounded
    # inputs; remaining differences are f32 accumulation-order noise.
    xq = x.astype(jnp.bfloat16).astype(jnp.float32)
    wq = weight.astype(jnp.bfloat16).astype(jnp.float32)
    ref_conv = lax.conv_general_dilated(
        xq, wq, window_strides=(1, 1),
        padding=((padding, padding), (padding, padding)),
        dimension_numbers=("NCHW", "OIHW", "NCHW"),
        precision=lax.Precision.HIGHEST)
    mean = jnp.mean(ref_conv, axis=(0, 2, 3), keepdims=True)
    var = jnp.mean((ref_conv - mean) ** 2, axis=(0, 2, 3), keepdims=True)
    ref = (ref_conv - mean) / jnp.sqrt(var + 1e-5)
    ref = ref * gamma.reshape(1, -1, 1, 1) + beta.reshape(1, -1, 1, 1)
    ref = jnp.maximum(ref, 0.0)

    assert out.shape == ref.shape, (out.shape, ref.shape)
    max_err = float(jnp.max(jnp.abs(out - ref)))
    assert max_err < 2e-3, f"max abs error too large: {max_err}"
    print("KERNEL_OK")
</pallas_src>

<mosaic_0001>
module attributes {stable_mosaic.version = 11 : i64} {
  func.func @_conv_stats_kernel(%arg0: i32, %arg1: memref<1x18x18x4xbf16, #tpu.memory_space<vmem>>, %arg2: memref<36x128xbf16, #tpu.memory_space<vmem>>, %arg3: memref<1x256x128xf32, #tpu.memory_space<vmem>>, %arg4: memref<1x1x128xf32, #tpu.memory_space<vmem>>, %arg5: memref<1x1x128xf32, #tpu.memory_space<vmem>>) attributes {dimension_semantics = [#tpu.dimension_semantics<parallel>], iteration_bounds = array<i64: 2>, scalar_prefetch = 0 : i64, scratch_operands = 0 : i64, tpu.core_type = #tpu.core_type<tc>, window_params = [{transform_indices = @transform_0, window_bounds = array<i64: 1, 18, 18, 4>}, {pipeline_mode = #tpu.pipeline_mode<synchronous>, transform_indices = @transform_1, window_bounds = array<i64: 36, 128>}, {transform_indices = @transform_2, window_bounds = array<i64: 1, 256, 128>}, {transform_indices = @transform_3, window_bounds = array<i64: 1, 1, 128>}, {transform_indices = @transform_4, window_bounds = array<i64: 1, 1, 128>}]} {
    %c0 = arith.constant 0 : index
    %c0_0 = arith.constant 0 : index
    %c0_1 = arith.constant 0 : index
    %c0_2 = arith.constant 0 : index
    %0 = vector.load %arg1[%c0, %c0_0, %c0_1, %c0_2] : memref<1x18x18x4xbf16, #tpu.memory_space<vmem>>, vector<1x18x18x4xbf16>
    %1 = vector.shape_cast %0 : vector<1x18x18x4xbf16> to vector<18x18x4xbf16>
    %2 = arith.extf %1 : vector<18x18x4xbf16> to vector<18x18x4xf32>
    %3 = vector.extract_strided_slice %2 {offsets = [0, 0, 0], sizes = [16, 16, 4], strides = [1, 1, 1]} : vector<18x18x4xf32> to vector<16x16x4xf32>
    %4 = vector.shape_cast %3 : vector<16x16x4xf32> to vector<256x4xf32>
    %5 = vector.extract_strided_slice %2 {offsets = [0, 1, 0], sizes = [16, 16, 4], strides = [1, 1, 1]} : vector<18x18x4xf32> to vector<16x16x4xf32>
    %6 = vector.shape_cast %5 : vector<16x16x4xf32> to vector<256x4xf32>
    %7 = vector.extract_strided_slice %2 {offsets = [0, 2, 0], sizes = [16, 16, 4], strides = [1, 1, 1]} : vector<18x18x4xf32> to vector<16x16x4xf32>
    %8 = vector.shape_cast %7 : vector<16x16x4xf32> to vector<256x4xf32>
    %9 = vector.extract_strided_slice %2 {offsets = [1, 0, 0], sizes = [16, 16, 4], strides = [1, 1, 1]} : vector<18x18x4xf32> to vector<16x16x4xf32>
    %10 = vector.shape_cast %9 : vector<16x16x4xf32> to vector<256x4xf32>
    %11 = vector.extract_strided_slice %2 {offsets = [1, 1, 0], sizes = [16, 16, 4], strides = [1, 1, 1]} : vector<18x18x4xf32> to vector<16x16x4xf32>
    %12 = vector.shape_cast %11 : vector<16x16x4xf32> to vector<256x4xf32>
    %13 = vector.extract_strided_slice %2 {offsets = [1, 2, 0], sizes = [16, 16, 4], strides = [1, 1, 1]} : vector<18x18x4xf32> to vector<16x16x4xf32>
    %14 = vector.shape_cast %13 : vector<16x16x4xf32> to vector<256x4xf32>
    %15 = vector.extract_strided_slice %2 {offsets = [2, 0, 0], sizes = [16, 16, 4], strides = [1, 1, 1]} : vector<18x18x4xf32> to vector<16x16x4xf32>
    %16 = vector.shape_cast %15 : vector<16x16x4xf32> to vector<256x4xf32>
    %17 = vector.extract_strided_slice %2 {offsets = [2, 1, 0], sizes = [16, 16, 4], strides = [1, 1, 1]} : vector<18x18x4xf32> to vector<16x16x4xf32>
    %18 = vector.shape_cast %17 : vector<16x16x4xf32> to vector<256x4xf32>
    %19 = vector.extract_strided_slice %2 {offsets = [2, 2, 0], sizes = [16, 16, 4], strides = [1, 1, 1]} : vector<18x18x4xf32> to vector<16x16x4xf32>
    %20 = vector.shape_cast %19 : vector<16x16x4xf32> to vector<256x4xf32>
    %21 = tpu.concatenate %4, %6, %8, %10, %12, %14, %16, %18, %20 in 1 : vector<256x4xf32>, vector<256x4xf32>, vector<256x4xf32>, vector<256x4xf32>, vector<256x4xf32>, vector<256x4xf32>, vector<256x4xf32>, vector<256x4xf32>, vector<256x4xf32> -> vector<256x36xf32>
    %22 = arith.truncf %21 : vector<256x36xf32> to vector<256x36xbf16>
    %c0_3 = arith.constant 0 : index
    %c0_4 = arith.constant 0 : index
    %23 = vector.load %arg2[%c0_3, %c0_4] : memref<36x128xbf16, #tpu.memory_space<vmem>>, vector<36x128xbf16>
    %cst = arith.constant dense<0.000000e+00> : vector<256x128xf32>
    %24 = tpu.matmul %22, %23, %cst {dimension_numbers = #tpu.dot_dimension_numbers<[1], [0], [0], [1], [0, 0, 1, 1], [], []>} : vector<256x36xbf16>, vector<36x128xbf16>, vector<256x128xf32> -> vector<256x128xf32>
    %25 = vector.shape_cast %24 : vector<256x128xf32> to vector<1x256x128xf32>
    %c0_5 = arith.constant 0 : index
    %c0_6 = arith.constant 0 : index
    %c0_7 = arith.constant 0 : index
    %26 = vector.load %arg3[%c0_5, %c0_6, %c0_7] : memref<1x256x128xf32, #tpu.memory_space<vmem>>, vector<1x256x128xf32>
    tpu.vector_store %arg3[%c0_5, %c0_6, %c0_7], %25 {strides = array<i32>} : memref<1x256x128xf32, #tpu.memory_space<vmem>>, vector<1x256x128xf32>,
    %cst_8 = arith.constant dense<0.000000e+00> : vector<128xf32>
    %27 = vector.multi_reduction <add>, %24, %cst_8 [0] : vector<256x128xf32> to vector<128xf32>
    %28 = vector.shape_cast %27 : vector<128xf32> to vector<1x128xf32>
    %29 = vector.shape_cast %28 : vector<1x128xf32> to vector<1x1x128xf32>
    %c0_9 = arith.constant 0 : index
    %c0_10 = arith.constant 0 : index
    %c0_11 = arith.constant 0 : index
    %30 = vector.load %arg4[%c0_9, %c0_10, %c0_11] : memref<1x1x128xf32, #tpu.memory_space<vmem>>, vector<1x1x128xf32>
    tpu.vector_store %arg4[%c0_9, %c0_10, %c0_11], %29 {strides = array<i32>} : memref<1x1x128xf32, #tpu.memory_space<vmem>>, vector<1x1x128xf32>,
    %31 = arith.mulf %24, %24 : vector<256x128xf32>
    %cst_12 = arith.constant dense<0.000000e+00> : vector<128xf32>
    %32 = vector.multi_reduction <add>, %31, %cst_12 [0] : vector<256x128xf32> to vector<128xf32>
    %33 = vector.shape_cast %32 : vector<128xf32> to vector<1x128xf32>
    %34 = vector.shape_cast %33 : vector<1x128xf32> to vector<1x1x128xf32>
    %c0_13 = arith.constant 0 : index
    %c0_14 = arith.constant 0 : index
    %c0_15 = arith.constant 0 : index
    %35 = vector.load %arg5[%c0_13, %c0_14, %c0_15] : memref<1x1x128xf32, #tpu.memory_space<vmem>>, vector<1x1x128xf32>
    tpu.vector_store %arg5[%c0_13, %c0_14, %c0_15], %34 {strides = array<i32>} : memref<1x1x128xf32, #tpu.memory_space<vmem>>, vector<1x1x128xf32>,
    return
  }
  func.func @transform_0(%arg0: i32) -> (i32, i32, i32, i32) {
    %c0_i32 = arith.constant 0 : i32
    %c0_i32_0 = arith.constant 0 : i32
    %c0_i32_1 = arith.constant 0 : i32
    %c0_i32_2 = arith.constant 0 : i32
    return %arg0, %c0_i32, %c0_i32_0, %c0_i32_1 : i32, i32, i32, i32
  }
  func.func @transform_1(%arg0: i32) -> (i32, i32) {
    %c0_i32 = arith.constant 0 : i32
    %c0_i32_0 = arith.constant 0 : i32
    %c0_i32_1 = arith.constant 0 : i32
    return %c0_i32, %c0_i32_0 : i32, i32
  }
  func.func @transform_2(%arg0: i32) -> (i32, i32, i32) {
    %c0_i32 = arith.constant 0 : i32
    %c0_i32_0 = arith.constant 0 : i32
    %c0_i32_1 = arith.constant 0 : i32
    return %arg0, %c0_i32, %c0_i32_0 : i32, i32, i32
  }
  func.func @transform_3(%arg0: i32) -> (i32, i32, i32) {
    %c0_i32 = arith.constant 0 : i32
    %c0_i32_0 = arith.constant 0 : i32
    %c0_i32_1 = arith.constant 0 : i32
    return %arg0, %c0_i32, %c0_i32_0 : i32, i32, i32
  }
  func.func @transform_4(%arg0: i32) -> (i32, i32, i32) {
    %c0_i32 = arith.constant 0 : i32
    %c0_i32_0 = arith.constant 0 : i32
    %c0_i32_1 = arith.constant 0 : i32
    return %arg0, %c0_i32, %c0_i32_0 : i32, i32, i32
  }
}

</mosaic_0001>

<llo_original>
// kernel: tpu_custom_call.1
$region0: #{tpu_custom_call.1}
  #allocation0 [shape = 'u32[]', space=smem, size = 0x4, offset = 0x4, fixed_abs, tag = 'smem constant byte address 0x4 - core index']
  #allocation1 [shape = 'u32[144,128]{1,0:T(1,128)}', space=vmem, size = 0x12000, scoped, tag = 'internal scratch']
  %s0 = inlined_call_operand.vmem [shape: bf16[2,18,18,4], index: 0, kind: input, shape index: {}]
  %s1 = inlined_call_operand.vmem [shape: bf16[36,128], index: 1, kind: input, shape index: {}]
  %s2 = inlined_call_operand.hbm [shape: f32[2,256,128], index: 2, kind: output, shape index: {0}]
  %s3 = inlined_call_operand.hbm [shape: f32[2,1,128], index: 3, kind: output, shape index: {1}]
  %s4 = inlined_call_operand.hbm [shape: f32[2,1,128], index: 4, kind: output, shape index: {2}]
  %5 = xla_tuple %s2, %s3, %s4
  %s6 = sld [smem:[#allocation0]]
  $region57: #{tpu_custom_call.1} parent=0
    _
  %s8 = ssub.s32 1, %s6
  %s9 = scalar_select 0, %s8, %s6
  $region1: #{tpu_custom_call.1} parent=0
    #allocation2 [shape = 'u8[262144]{0}', space=vmem, size = 0x40000, scoped, tag = 'output window, operand 0']
    #allocation3 [shape = 's32[2]{0}', space=sflag, size = 0x8, scoped, tag = 'scoped memory for tpu_custom_call.1']
    #allocation4 [shape = 'u8[1024]{0}', space=vmem, size = 0x400, scoped, tag = 'output window, operand 1']
    #allocation5 [shape = 's32[2]{0}', space=sflag, size = 0x8, scoped, tag = 'scoped memory for tpu_custom_call.1']
    #allocation6 [shape = 'u8[1024]{0}', space=vmem, size = 0x400, scoped, tag = 'output window, operand 2']
    %10 = vsyncpa [#allocation3], 0
    %s11 = scalar_lea.sflag [#allocation3], 1
    %12 = vsyncpa %s11, 0
    %13 = vsyncpa [#allocation5], 0
    %s14 = scalar_lea.sflag [#allocation5], 1
    %15 = vsyncpa %s14, 0
    loop: start=0, step=1, limit=4
    $region2: #{tpu_custom_call.1} parent=1 // loop_pre_header
      _
    $region3: #{tpu_custom_call.1} parent=1 // loop_header
      %s17 = sphi 0, %s21
      %p18 = scmp.ge.s32.totalorder %s17, 4
      %s27 = sphi 0, %s29
      %s30 = sphi 0, %s27
      %s31 = sphi 0, %s30
      %s47 = sphi 0, %s31
      %s51 = sphi 0, %s51
      %s53 = sphi 0, %s51
      %s54 = sphi 0, %s53
      %s68 = sphi 0, %s54
      %s74 = sphi 0, %s76
      %s77 = sphi 0, %s74
      %s78 = sphi 0, %s77
      %s94 = sphi 0, %s78
      %s100 = sphi 0, %s102
      %s103 = sphi 0, %s100
      %s104 = sphi 0, %s103
      %s120 = sphi 0, %s104
      %s126 = sphi 0, %s128
      %s129 = sphi 0, %s126
      %s130 = sphi 0, %s129
      %s146 = sphi 0, %s130
    $region4: #{tpu_custom_call.1} parent=1 // loop_header_branch
      %20 = sbr.rel (%p18) target = $region8
    $region5: #{tpu_custom_call.1} parent=1 // loop_body
      %s22 = ssub.s32 %s17, 1
      %s23 = ssub.s32 %s17, 2
      %s24 = sadd.s32 %s17, 1
      %s25 = ssub.s32 %s17, %s24
      %p26 = scmp.eq.s32.totalorder %s25, 0
      %s28 = sadd.s32 %s27, 1
      %s29 = scalar_select %p26, %s27, %s28
      %p32 = pneg %p26
      %p33 = scmp.eq.s32.totalorder %s17, 1
      %p34 = por %p32, %p33
      %p35 = scmp.ne.s32.totalorder %s27, %s30
      %p36 = scmp.eq.s32.totalorder %s17, 0
      %p37 = por %p35, %p36
      %p38 = scmp.ne.s32.totalorder %s27, %s30
      %p39 = scmp.eq.s32.totalorder %s22, 1
      %p40 = por %p38, %p39
      %p41 = scmp.ne.s32.totalorder %s30, %s31
      %p42 = scmp.eq.s32.totalorder %s22, 0
      %p43 = por %p41, %p42
      %p44 = scmp.ne.s32.totalorder %s30, %s31
      %p45 = scmp.eq.s32.totalorder %s23, 1
      %p46 = por %p44, %p45
      %p48 = scmp.ne.s32.totalorder %s31, %s47
      %p49 = scmp.eq.s32.totalorder %s23, 0
      %p50 = por %p48, %p49
      %s52 = sadd.s32 %s51, 1
      %p55 = scmp.eq.s32.totalorder %s17, 1
      %p56 = scmp.ne.s32.totalorder %s51, %s53
      %p57 = scmp.eq.s32.totalorder %s17, 0
      %p58 = por %p56, %p57
      %p59 = scmp.ne.s32.totalorder %s51, %s53
      %p60 = scmp.eq.s32.totalorder %s22, 1
      %p61 = por %p59, %p60
      %p62 = scmp.ne.s32.totalorder %s53, %s54
      %p63 = scmp.eq.s32.totalorder %s22, 0
      %p64 = por %p62, %p63
      %p65 = scmp.ne.s32.totalorder %s53, %s54
      %p66 = scmp.eq.s32.totalorder %s23, 1
      %p67 = por %p65, %p66
      %p69 = scmp.ne.s32.totalorder %s54, %s68
      %p70 = scmp.eq.s32.totalorder %s23, 0
      %p71 = por %p69, %p70
      %s72 = ssub.s32 %s17, %s24
      %p73 = scmp.eq.s32.totalorder %s72, 0
      %s75 = sadd.s32 %s74, 1
      %s76 = scalar_select %p73, %s74, %s75
      %p79 = pneg %p73
      %p80 = scmp.eq.s32.totalorder %s17, 1
      %p81 = por %p79, %p80
      %p82 = scmp.ne.s32.totalorder %s74, %s77
      %p83 = scmp.eq.s32.totalorder %s17, 0
      %p84 = por %p82, %p83
      %p85 = scmp.ne.s32.totalorder %s74, %s77
      %p86 = scmp.eq.s32.totalorder %s22, 1
      %p87 = por %p85, %p86
      %p88 = scmp.ne.s32.totalorder %s77, %s78
      %p89 = scmp.eq.s32.totalorder %s22, 0
      %p90 = por %p88, %p89
      %p91 = scmp.ne.s32.totalorder %s77, %s78
      %p92 = scmp.eq.s32.totalorder %s23, 1
      %p93 = por %p91, %p92
      %p95 = scmp.ne.s32.totalorder %s78, %s94
      %p96 = scmp.eq.s32.totalorder %s23, 0
      %p97 = por %p95, %p96
      %s98 = ssub.s32 %s17, %s24
      %p99 = scmp.eq.s32.totalorder %s98, 0
      %s101 = sadd.s32 %s100, 1
      %s102 = scalar_select %p99, %s100, %s101
      %p105 = pneg %p99
      %p106 = scmp.eq.s32.totalorder %s17, 1
      %p107 = por %p105, %p106
      %p108 = scmp.ne.s32.totalorder %s100, %s103
      %p109 = scmp.eq.s32.totalorder %s17, 0
      %p110 = por %p108, %p109
      %p111 = scmp.ne.s32.totalorder %s100, %s103
      %p112 = scmp.eq.s32.totalorder %s22, 1
      %p113 = por %p111, %p112
      %p114 = scmp.ne.s32.totalorder %s103, %s104
      %p115 = scmp.eq.s32.totalorder %s22, 0
      %p116 = por %p114, %p115
      %p117 = scmp.ne.s32.totalorder %s103, %s104
      %p118 = scmp.eq.s32.totalorder %s23, 1
      %p119 = por %p117, %p118
      %p121 = scmp.ne.s32.totalorder %s104, %s120
      %p122 = scmp.eq.s32.totalorder %s23, 0
      %p123 = por %p121, %p122
      %s124 = ssub.s32 %s17, %s24
      %p125 = scmp.eq.s32.totalorder %s124, 0
      %s127 = sadd.s32 %s126, 1
      %s128 = scalar_select %p125, %s126, %s127
      %p131 = pneg %p125
      %p132 = scmp.eq.s32.totalorder %s17, 1
      %p133 = por %p131, %p132
      %p134 = scmp.ne.s32.totalorder %s126, %s129
      %p135 = scmp.eq.s32.totalorder %s17, 0
      %p136 = por %p134, %p135
      %p137 = scmp.ne.s32.totalorder %s126, %s129
      %p138 = scmp.eq.s32.totalorder %s22, 1
      %p139 = por %p137, %p138
      %p140 = scmp.ne.s32.totalorder %s129, %s130
      %p141 = scmp.eq.s32.totalorder %s22, 0
      %p142 = por %p140, %p141
      %p143 = scmp.ne.s32.totalorder %s129, %s130
      %p144 = scmp.eq.s32.totalorder %s23, 1
      %p145 = por %p143, %p144
      %p147 = scmp.ne.s32.totalorder %s130, %s146
      %p148 = scmp.eq.s32.totalorder %s23, 0
      %p149 = por %p147, %p148
      %p150 = scmp.le.s32.totalorder 1, %s17
      %p151 = scmp.lt.s32.totalorder %s17, 3
      %p152 = pnand %p150, %p151
      %p153 = pneg %p152
      // Predicated region
      $region9: #{tpu_custom_call.1} parent=5 // pred_check
        _
      $region10: #{tpu_custom_call.1} parent=5 // pred_check_branch
        %155 = sbr.rel (%p152) target = $region12
      $region11: #{tpu_custom_call.1} parent=5 // pred_region
        %s156 = ssub.s32 %s17, 1
        // Predicated region
        $region13: #{tpu_custom_call.1} parent=11 // pred_check
          %p157 = pneg %p64
        $region14: #{tpu_custom_call.1} parent=11 // pred_check_branch
          %159 = sbr.rel (%p157) target = $region16
        $region15: #{tpu_custom_call.1} parent=11 // pred_region
          _
        $region16: #{tpu_custom_call.1} parent=11 // pred_fallthru
          _
      $region12: #{tpu_custom_call.1} parent=5 // pred_fallthru
        _
      %p160 = scmp.lt.s32.totalorder %s17, 2
      // Predicated region
      $region17: #{tpu_custom_call.1} parent=5 // pred_check
        %p161 = pneg %p160
      $region18: #{tpu_custom_call.1} parent=5 // pred_check_branch
        %163 = sbr.rel (%p161) target = $region20
      $region19: #{tpu_custom_call.1} parent=5 // pred_region
        // Predicated region
        $region21: #{tpu_custom_call.1} parent=19 // pred_check
          %p164 = pneg %p37
        $region22: #{tpu_custom_call.1} parent=19 // pred_check_branch
          %166 = sbr.rel (%p164) target = $region24
        $region23: #{tpu_custom_call.1} parent=19 // pred_region
          %p167 = scmp.lt.s32.totalorder %s17, 1
          %s168 = scalar_select %p167, %s17, 1
          %s169 = smul.addr %s168, 54
          %s170 = smul.addr %s169, 4
          %s171 = scalar_lea.vmem %s0, %s170
        $region24: #{tpu_custom_call.1} parent=19 // pred_fallthru
          _
      $region20: #{tpu_custom_call.1} parent=5 // pred_fallthru
        _
      %p172 = scmp.le.s32.totalorder 1, %s17
      %p173 = scmp.lt.s32.totalorder %s17, 3
      %p174 = pnand %p172, %p173
      %p175 = pneg %p174
      // Predicated region
      $region25: #{tpu_custom_call.1} parent=5 // pred_check
        _
      $region26: #{tpu_custom_call.1} parent=5 // pred_check_branch
        %177 = sbr.rel (%p174) target = $region28
      $region27: #{tpu_custom_call.1} parent=5 // pred_region
        %s178 = ssub.s32 %s17, 1
        %p179 = scmp.lt.s32.totalorder %s22, 1
        %s180 = scalar_select %p179, %s22, 1
        %s181 = smul.addr %s180, 54
        %s182 = smul.addr %s181, 4
        %s183 = scalar_lea.vmem %s0, %s182
        %p184 = pneg %p43
        %p185 = pneg %p40
        %p186 = pneg %p64
        %p187 = pneg %p61
        %p188 = pneg %p90
        %p189 = pneg %p87
        %s190 = sand.u32 %s77, 1
        %s191 = scalar_lea.sflag [#allocation3], %s190
        %s192 = sand.u32 %s77, 1
        %s193 = smul.addr %s192, 256
        %s194 = scalar_lea.vmem [#allocation2], %s193
        %p195 = pneg %p116
        %p196 = pneg %p113
        %s197 = sand.u32 %s22, 1
        %s198 = scalar_lea.sflag [#allocation5], %s197
        %s199 = sand.u32 %s103, 1
        %s200 = scalar_lea.vmem [#allocation4], %s199
        %p201 = pneg %p142
        %p202 = pneg %p139
        %s203 = sand.u32 %s22, 1
        %s204 = scalar_lea.sflag [#allocation5], %s203
        %s205 = sand.u32 %s129, 1
        %s206 = scalar_lea.vmem [#allocation6], %s205
        %p207 = scmp.lt.s32.totalorder %s22, 1
        %s208 = scalar_select %p207, %s22, 1
        %s209 = smul.addr %s208, 54
        %s210 = smul.addr %s209, 4
        %s211 = scalar_lea.vmem %s0, %s210
        %v213 = vld [vmem:[%s211] sm:$0xf]
        %v214 = vld [vmem:[%s211 + $0x4] sm:$0xf]
        %v215 = vld [vmem:[%s211 + $0x8] sm:$0x1]
        %v216 = vld [vmem:[%s211 + $0xc] sm:$0xf]
        %v217 = vld [vmem:[%s211 + $0x10] sm:$0xf]
        %v218 = vld [vmem:[%s211 + $0x14] sm:$0x1]
        %v219 = vld [vmem:[%s211 + $0x18] sm:$0xf]
        %v220 = vld [vmem:[%s211 + $0x1c] sm:$0xf]
        %v221 = vld [vmem:[%s211 + $0x20] sm:$0x1]
        %v222 = vld [vmem:[%s211 + $0x24] sm:$0xf]
        %v223 = vld [vmem:[%s211 + $0x28] sm:$0xf]
        %v224 = vld [vmem:[%s211 + $0x2c] sm:$0x1]
        %v225 = vld [vmem:[%s211 + $0x30] sm:$0xf]
        %v226 = vld [vmem:[%s211 + $0x34] sm:$0xf]
        %v227 = vld [vmem:[%s211 + $0x38] sm:$0x1]
        %v228 = vld [vmem:[%s211 + $0x3c] sm:$0xf]
        %v229 = vld [vmem:[%s211 + $0x40] sm:$0xf]
        %v230 = vld [vmem:[%s211 + $0x44] sm:$0x1]
        %v231 = vld [vmem:[%s211 + $0x48] sm:$0xf]
        %v232 = vld [vmem:[%s211 + $0x4c] sm:$0xf]
        %v233 = vld [vmem:[%s211 + $0x50] sm:$0x1]
        %v234 = vld [vmem:[%s211 + $0x54] sm:$0xf]
        %v235 = vld [vmem:[%s211 + $0x58] sm:$0xf]
        %v236 = vld [vmem:[%s211 + $0x5c] sm:$0x1]
        %v237 = vld [vmem:[%s211 + $0x60] sm:$0xf]
        %v238 = vld [vmem:[%s211 + $0x64] sm:$0xf]
        %v239 = vld [vmem:[%s211 + $0x68] sm:$0x1]
        %v240 = vld [vmem:[%s211 + $0x6c] sm:$0xf]
        %v241 = vld [vmem:[%s211 + $0x70] sm:$0xf]
        %v242 = vld [vmem:[%s211 + $0x74] sm:$0x1]
        %v243 = vld [vmem:[%s211 + $0x78] sm:$0xf]
        %v244 = vld [vmem:[%s211 + $0x7c] sm:$0xf]
        %v245 = vld [vmem:[%s211 + $0x80] sm:$0x1]
        %v246 = vld [vmem:[%s211 + $0x84] sm:$0xf]
        %v247 = vld [vmem:[%s211 + $0x88] sm:$0xf]
        %v248 = vld [vmem:[%s211 + $0x8c] sm:$0x1]
        %v249 = vld [vmem:[%s211 + $0x90] sm:$0xf]
        %v250 = vld [vmem:[%s211 + $0x94] sm:$0xf]
        %v251 = vld [vmem:[%s211 + $0x98] sm:$0x1]
        %v252 = vld [vmem:[%s211 + $0x9c] sm:$0xf]
        %v253 = vld [vmem:[%s211 + $0xa0] sm:$0xf]
        %v254 = vld [vmem:[%s211 + $0xa4] sm:$0x1]
        %v255 = vld [vmem:[%s211 + $0xa8] sm:$0xf]
        %v256 = vld [vmem:[%s211 + $0xac] sm:$0xf]
        %v257 = vld [vmem:[%s211 + $0xb0] sm:$0x1]
        %v258 = vld [vmem:[%s211 + $0xb4] sm:$0xf]
        %v259 = vld [vmem:[%s211 + $0xb8] sm:$0xf]
        %v260 = vld [vmem:[%s211 + $0xbc] sm:$0x1]
        %v261 = vld [vmem:[%s211 + $0xc0] sm:$0xf]
        %v262 = vld [vmem:[%s211 + $0xc4] sm:$0xf]
        %v263 = vld [vmem:[%s211 + $0xc8] sm:$0x1]
        %v264 = vld [vmem:[%s211 + $0xcc] sm:$0xf]
        %v265 = vld [vmem:[%s211 + $0xd0] sm:$0xf]
        %v266 = vld [vmem:[%s211 + $0xd4] sm:$0x1]
        %v267 = vunpack.c.l.bf16 %v213
        %v268 = vunpack.c.l.bf16 %v214
        %v269 = vunpack.c.l.bf16 %v215
        %v270 = vunpack.c.l.bf16 %v216
        %v271 = vunpack.c.l.bf16 %v217
        %v272 = vunpack.c.l.bf16 %v218
        %v273 = vunpack.c.l.bf16 %v219
        %v274 = vunpack.c.l.bf16 %v220
        %v275 = vunpack.c.l.bf16 %v221
        %v276 = vunpack.c.l.bf16 %v222
        %v277 = vunpack.c.l.bf16 %v223
        %v278 = vunpack.c.l.bf16 %v224
        %v279 = vunpack.c.l.bf16 %v225
        %v280 = vunpack.c.l.bf16 %v226
        %v281 = vunpack.c.l.bf16 %v227
        %v282 = vunpack.c.l.bf16 %v228
        %v283 = vunpack.c.l.bf16 %v229
        %v284 = vunpack.c.l.bf16 %v230
        %v285 = vunpack.c.l.bf16 %v231
        %v286 = vunpack.c.l.bf16 %v232
        %v287 = vunpack.c.l.bf16 %v233
        %v288 = vunpack.c.l.bf16 %v234
        %v289 = vunpack.c.l.bf16 %v235
        %v290 = vunpack.c.l.bf16 %v236
        %v291 = vunpack.c.l.bf16 %v237
        %v292 = vunpack.c.l.bf16 %v238
        %v293 = vunpack.c.l.bf16 %v239
        %v294 = vunpack.c.l.bf16 %v240
        %v295 = vunpack.c.l.bf16 %v241
        %v296 = vunpack.c.l.bf16 %v242
        %v297 = vunpack.c.l.bf16 %v243
        %v298 = vunpack.c.l.bf16 %v244
        %v299 = vunpack.c.l.bf16 %v245
        %v300 = vunpack.c.l.bf16 %v246
        %v301 = vunpack.c.l.bf16 %v247
        %v302 = vunpack.c.l.bf16 %v248
        %v303 = vunpack.c.l.bf16 %v249
        %v304 = vunpack.c.l.bf16 %v250
        %v305 = vunpack.c.l.bf16 %v251
        %v306 = vunpack.c.l.bf16 %v252
        %v307 = vunpack.c.l.bf16 %v253
        %v308 = vunpack.c.l.bf16 %v254
        %v309 = vunpack.c.l.bf16 %v255
        %v310 = vunpack.c.l.bf16 %v256
        %v311 = vunpack.c.l.bf16 %v257
        %v312 = vunpack.c.l.bf16 %v258
        %v313 = vunpack.c.l.bf16 %v259
        %v314 = vunpack.c.l.bf16 %v260
        %v315 = vunpack.c.l.bf16 %v261
        %v316 = vunpack.c.l.bf16 %v262
        %v317 = vunpack.c.l.bf16 %v263
        %v318 = vunpack.c.l.bf16 %v264
        %v319 = vunpack.c.l.bf16 %v265
        %v320 = vunpack.c.l.bf16 %v266
        %vm369 = vcmask 1046528
        %v370 = vrot.slane %v267, 1
        %v371 = vrot.slane %v268, 1
        %v372 = vsel %vm369, %v370, %v371
        %v373 = vrot.slane %v269, 1
        %v374 = vsel %vm369, %v371, %v373
        %v375 = vrot.slane %v270, 1
        %v376 = vrot.slane %v271, 1
        %v377 = vsel %vm369, %v375, %v376
        %v378 = vrot.slane %v272, 1
        %v379 = vsel %vm369, %v376, %v378
        %v380 = vrot.slane %v273, 1
        %v381 = vrot.slane %v274, 1
        %v382 = vsel %vm369, %v380, %v381
        %v383 = vrot.slane %v275, 1
        %v384 = vsel %vm369, %v381, %v383
        %v385 = vrot.slane %v276, 1
        %v386 = vrot.slane %v277, 1
        %v387 = vsel %vm369, %v385, %v386
        %v388 = vrot.slane %v278, 1
        %v389 = vsel %vm369, %v386, %v388
        %v390 = vrot.slane %v279, 1
        %v391 = vrot.slane %v280, 1
        %v392 = vsel %vm369, %v390, %v391
        %v393 = vrot.slane %v281, 1
        %v394 = vsel %vm369, %v391, %v393
        %v395 = vrot.slane %v282, 1
        %v396 = vrot.slane %v283, 1
        %v397 = vsel %vm369, %v395, %v396
        %v398 = vrot.slane %v284, 1
        %v399 = vsel %vm369, %v396, %v398
        %v400 = vrot.slane %v285, 1
        %v401 = vrot.slane %v286, 1
        %v402 = vsel %vm369, %v400, %v401
        %v403 = vrot.slane %v287, 1
        %v404 = vsel %vm369, %v401, %v403
        %v405 = vrot.slane %v288, 1
        %v406 = vrot.slane %v289, 1
        %v407 = vsel %vm369, %v405, %v406
        %v408 = vrot.slane %v290, 1
        %v409 = vsel %vm369, %v406, %v408
        %v410 = vrot.slane %v291, 1
        %v411 = vrot.slane %v292, 1
        %v412 = vsel %vm369, %v410, %v411
        %v413 = vrot.slane %v293, 1
        %v414 = vsel %vm369, %v411, %v413
        %v415 = vrot.slane %v294, 1
        %v416 = vrot.slane %v295, 1
        %v417 = vsel %vm369, %v415, %v416
        %v418 = vrot.slane %v296, 1
        %v419 = vsel %vm369, %v416, %v418
        %v420 = vrot.slane %v297, 1
        %v421 = vrot.slane %v298, 1
        %v422 = vsel %vm369, %v420, %v421
        %v423 = vrot.slane %v299, 1
        %v424 = vsel %vm369, %v421, %v423
        %v425 = vrot.slane %v300, 1
        %v426 = vrot.slane %v301, 1
        %v427 = vsel %vm369, %v425, %v426
        %v428 = vrot.slane %v302, 1
        %v429 = vsel %vm369, %v426, %v428
        %v430 = vrot.slane %v303, 1
        %v431 = vrot.slane %v304, 1
        %v432 = vsel %vm369, %v430, %v431
        %v433 = vrot.slane %v305, 1
        %v434 = vsel %vm369, %v431, %v433
        %v435 = vrot.slane %v306, 1
        %v436 = vrot.slane %v307, 1
        %v437 = vsel %vm369, %v435, %v436
        %v438 = vrot.slane %v308, 1
        %v439 = vsel %vm369, %v436, %v438
        %v440 = vrot.slane %v309, 1
        %v441 = vrot.slane %v310, 1
        %v442 = vsel %vm369, %v440, %v441
        %v443 = vrot.slane %v311, 1
        %v444 = vsel %vm369, %v441, %v443
        %v445 = vrot.slane %v312, 1
        %v446 = vrot.slane %v313, 1
        %v447 = vsel %vm369, %v445, %v446
        %v448 = vrot.slane %v314, 1
        %v449 = vsel %vm369, %v446, %v448
        %vm450 = vcmask 1045504
        %v451 = vrot.slane %v267, 2
        %v452 = vrot.slane %v268, 2
        %v453 = vsel %vm450, %v451, %v452
        %v454 = vrot.slane %v269, 2
        %v455 = vsel %vm450, %v452, %v454
        %v456 = vrot.slane %v270, 2
        %v457 = vrot.slane %v271, 2
        %v458 = vsel %vm450, %v456, %v457
        %v459 = vrot.slane %v272, 2
        %v460 = vsel %vm450, %v457, %v459
        %v461 = vrot.slane %v273, 2
        %v462 = vrot.slane %v274, 2
        %v463 = vsel %vm450, %v461, %v462
        %v464 = vrot.slane %v275, 2
        %v465 = vsel %vm450, %v462, %v464
        %v466 = vrot.slane %v276, 2
        %v467 = vrot.slane %v277, 2
        %v468 = vsel %vm450, %v466, %v467
        %v469 = vrot.slane %v278, 2
        %v470 = vsel %vm450, %v467, %v469
        %v471 = vrot.slane %v279, 2
        %v472 = vrot.slane %v280, 2
        %v473 = vsel %vm450, %v471, %v472
        %v474 = vrot.slane %v281, 2
        %v475 = vsel %vm450, %v472, %v474
        %v476 = vrot.slane %v282, 2
        %v477 = vrot.slane %v283, 2
        %v478 = vsel %vm450, %v476, %v477
        %v479 = vrot.slane %v284, 2
        %v480 = vsel %vm450, %v477, %v479
        %v481 = vrot.slane %v285, 2
        %v482 = vrot.slane %v286, 2
        %v483 = vsel %vm450, %v481, %v482
        %v484 = vrot.slane %v287, 2
        %v485 = vsel %vm450, %v482, %v484
        %v486 = vrot.slane %v288, 2
        %v487 = vrot.slane %v289, 2
        %v488 = vsel %vm450, %v486, %v487
        %v489 = vrot.slane %v290, 2
        %v490 = vsel %vm450, %v487, %v489
        %v491 = vrot.slane %v291, 2
        %v492 = vrot.slane %v292, 2
        %v493 = vsel %vm450, %v491, %v492
        %v494 = vrot.slane %v293, 2
        %v495 = vsel %vm450, %v492, %v494
        %v496 = vrot.slane %v294, 2
        %v497 = vrot.slane %v295, 2
        %v498 = vsel %vm450, %v496, %v497
        %v499 = vrot.slane %v296, 2
        %v500 = vsel %vm450, %v497, %v499
        %v501 = vrot.slane %v297, 2
        %v502 = vrot.slane %v298, 2
        %v503 = vsel %vm450, %v501, %v502
        %v504 = vrot.slane %v299, 2
        %v505 = vsel %vm450, %v502, %v504
        %v506 = vrot.slane %v300, 2
        %v507 = vrot.slane %v301, 2
        %v508 = vsel %vm450, %v506, %v507
        %v509 = vrot.slane %v302, 2
        %v510 = vsel %vm450, %v507, %v509
        %v511 = vrot.slane %v303, 2
        %v512 = vrot.slane %v304, 2
        %v513 = vsel %vm450, %v511, %v512
        %v514 = vrot.slane %v305, 2
        %v515 = vsel %vm450, %v512, %v514
        %v516 = vrot.slane %v306, 2
        %v517 = vrot.slane %v307, 2
        %v518 = vsel %vm450, %v516, %v517
        %v519 = vrot.slane %v308, 2
        %v520 = vsel %vm450, %v517, %v519
        %v521 = vrot.slane %v309, 2
        %v522 = vrot.slane %v310, 2
        %v523 = vsel %vm450, %v521, %v522
        %v524 = vrot.slane %v311, 2
        %v525 = vsel %vm450, %v522, %v524
        %v526 = vrot.slane %v312, 2
        %v527 = vrot.slane %v313, 2
        %v528 = vsel %vm450, %v526, %v527
        %v529 = vrot.slane %v314, 2
        %v530 = vsel %vm450, %v527, %v529
        %v534 = vrot.slane %v315, 1
        %v535 = vrot.slane %v316, 1
        %v536 = vsel %vm369, %v534, %v535
        %v537 = vrot.slane %v317, 1
        %v538 = vsel %vm369, %v535, %v537
        %v539 = vrot.slane %v315, 2
        %v540 = vrot.slane %v316, 2
        %v541 = vsel %vm450, %v539, %v540
        %v542 = vrot.slane %v317, 2
        %v543 = vsel %vm450, %v540, %v542
        %v547 = vrot.slane %v318, 1
        %v548 = vrot.slane %v319, 1
        %v549 = vsel %vm369, %v547, %v548
        %v550 = vrot.slane %v320, 1
        %v551 = vsel %vm369, %v548, %v550
        %v552 = vrot.slane %v318, 2
        %v553 = vrot.slane %v319, 2
        %v554 = vsel %vm450, %v552, %v553
        %v555 = vrot.slane %v320, 2
        %v556 = vsel %vm450, %v553, %v555
        %557 = vrot.lane.b32.xlu0 %v372, 4
        %v558 = vpop.permute.xlu0 %557
        %559 = vrot.lane.b32.xlu0 %v374, 4
        %v560 = vpop.permute.xlu0 %559
        %561 = vrot.lane.b32.xlu0 %v377, 4
        %v562 = vpop.permute.xlu0 %561
        %563 = vrot.lane.b32.xlu0 %v379, 4
        %v564 = vpop.permute.xlu0 %563
        %565 = vrot.lane.b32.xlu0 %v382, 4
        %v566 = vpop.permute.xlu0 %565
        %567 = vrot.lane.b32.xlu0 %v384, 4
        %v568 = vpop.permute.xlu0 %567
        %569 = vrot.lane.b32.xlu0 %v387, 4
        %v570 = vpop.permute.xlu0 %569
        %571 = vrot.lane.b32.xlu0 %v389, 4
        %v572 = vpop.permute.xlu0 %571
        %573 = vrot.lane.b32.xlu0 %v392, 4
        %v574 = vpop.permute.xlu0 %573
        %575 = vrot.lane.b32.xlu0 %v394, 4
        %v576 = vpop.permute.xlu0 %575
        %577 = vrot.lane.b32.xlu0 %v397, 4
        %v578 = vpop.permute.xlu0 %577
        %579 = vrot.lane.b32.xlu0 %v399, 4
        %v580 = vpop.permute.xlu0 %579
        %581 = vrot.lane.b32.xlu0 %v402, 4
        %v582 = vpop.permute.xlu0 %581
        %583 = vrot.lane.b32.xlu0 %v404, 4
        %v584 = vpop.permute.xlu0 %583
        %585 = vrot.lane.b32.xlu0 %v407, 4
        %v586 = vpop.permute.xlu0 %585
        %587 = vrot.lane.b32.xlu0 %v409, 4
        %v588 = vpop.permute.xlu0 %587
        %589 = vrot.lane.b32.xlu0 %v412, 4
        %v590 = vpop.permute.xlu0 %589
        %591 = vrot.lane.b32.xlu0 %v414, 4
        %v592 = vpop.permute.xlu0 %591
        %593 = vrot.lane.b32.xlu0 %v417, 4
        %v594 = vpop.permute.xlu0 %593
        %595 = vrot.lane.b32.xlu0 %v419, 4
        %v596 = vpop.permute.xlu0 %595
        %597 = vrot.lane.b32.xlu0 %v422, 4
        %v598 = vpop.permute.xlu0 %597
        %599 = vrot.lane.b32.xlu0 %v424, 4
        %v600 = vpop.permute.xlu0 %599
        %601 = vrot.lane.b32.xlu0 %v427, 4
        %v602 = vpop.permute.xlu0 %601
        %603 = vrot.lane.b32.xlu0 %v429, 4
        %v604 = vpop.permute.xlu0 %603
        %605 = vrot.lane.b32.xlu0 %v432, 4
        %v606 = vpop.permute.xlu0 %605
        %607 = vrot.lane.b32.xlu0 %v434, 4
        %v608 = vpop.permute.xlu0 %607
        %609 = vrot.lane.b32.xlu0 %v437, 4
        %v610 = vpop.permute.xlu0 %609
        %611 = vrot.lane.b32.xlu0 %v439, 4
        %v612 = vpop.permute.xlu0 %611
        %613 = vrot.lane.b32.xlu0 %v442, 4
        %v614 = vpop.permute.xlu0 %613
        %615 = vrot.lane.b32.xlu0 %v444, 4
        %v616 = vpop.permute.xlu0 %615
        %617 = vrot.lane.b32.xlu0 %v447, 4
        %v618 = vpop.permute.xlu0 %617
        %619 = vrot.lane.b32.xlu0 %v449, 4
        %v620 = vpop.permute.xlu0 %619
        %653 = vrot.lane.b32.xlu0 %v453, 8
        %v654 = vpop.permute.xlu0 %653
        %655 = vrot.lane.b32.xlu0 %v455, 8
        %v656 = vpop.permute.xlu0 %655
        %657 = vrot.lane.b32.xlu0 %v458, 8
        %v658 = vpop.permute.xlu0 %657
        %659 = vrot.lane.b32.xlu0 %v460, 8
        %v660 = vpop.permute.xlu0 %659
        %661 = vrot.lane.b32.xlu0 %v463, 8
        %v662 = vpop.permute.xlu0 %661
        %663 = vrot.lane.b32.xlu0 %v465, 8
        %v664 = vpop.permute.xlu0 %663
        %665 = vrot.lane.b32.xlu0 %v468, 8
        %v666 = vpop.permute.xlu0 %665
        %667 = vrot.lane.b32.xlu0 %v470, 8
        %v668 = vpop.permute.xlu0 %667
        %669 = vrot.lane.b32.xlu0 %v473, 8
        %v670 = vpop.permute.xlu0 %669
        %671 = vrot.lane.b32.xlu0 %v475, 8
        %v672 = vpop.permute.xlu0 %671
        %673 = vrot.lane.b32.xlu0 %v478, 8
        %v674 = vpop.permute.xlu0 %673
        %675 = vrot.lane.b32.xlu0 %v480, 8
        %v676 = vpop.permute.xlu0 %675
        %677 = vrot.lane.b32.xlu0 %v483, 8
        %v678 = vpop.permute.xlu0 %677
        %679 = vrot.lane.b32.xlu0 %v485, 8
        %v680 = vpop.permute.xlu0 %679
        %681 = vrot.lane.b32.xlu0 %v488, 8
        %v682 = vpop.permute.xlu0 %681
        %683 = vrot.lane.b32.xlu0 %v490, 8
        %v684 = vpop.permute.xlu0 %683
        %685 = vrot.lane.b32.xlu0 %v493, 8
        %v686 = vpop.permute.xlu0 %685
        %687 = vrot.lane.b32.xlu0 %v495, 8
        %v688 = vpop.permute.xlu0 %687
        %689 = vrot.lane.b32.xlu0 %v498, 8
        %v690 = vpop.permute.xlu0 %689
        %691 = vrot.lane.b32.xlu0 %v500, 8
        %v692 = vpop.permute.xlu0 %691
        %693 = vrot.lane.b32.xlu0 %v503, 8
        %v694 = vpop.permute.xlu0 %693
        %695 = vrot.lane.b32.xlu0 %v505, 8
        %v696 = vpop.permute.xlu0 %695
        %697 = vrot.lane.b32.xlu0 %v508, 8
        %v698 = vpop.permute.xlu0 %697
        %699 = vrot.lane.b32.xlu0 %v510, 8
        %v700 = vpop.permute.xlu0 %699
        %701 = vrot.lane.b32.xlu0 %v513, 8
        %v702 = vpop.permute.xlu0 %701
        %703 = vrot.lane.b32.xlu0 %v515, 8
        %v704 = vpop.permute.xlu0 %703
        %705 = vrot.lane.b32.xlu0 %v518, 8
        %v706 = vpop.permute.xlu0 %705
        %707 = vrot.lane.b32.xlu0 %v520, 8
        %v708 = vpop.permute.xlu0 %707
        %709 = vrot.lane.b32.xlu0 %v523, 8
        %v710 = vpop.permute.xlu0 %709
        %711 = vrot.lane.b32.xlu0 %v525, 8
        %v712 = vpop.permute.xlu0 %711
        %713 = vrot.lane.b32.xlu0 %v528, 8
        %v714 = vpop.permute.xlu0 %713
        %715 = vrot.lane.b32.xlu0 %v530, 8
        %v716 = vpop.permute.xlu0 %715
        %749 = vrot.lane.b32.xlu0 %v270, 12
        %v750 = vpop.permute.xlu0 %749
        %751 = vrot.lane.b32.xlu0 %v271, 12
        %v752 = vpop.permute.xlu0 %751
        %753 = vrot.lane.b32.xlu0 %v273, 12
        %v754 = vpop.permute.xlu0 %753
        %755 = vrot.lane.b32.xlu0 %v274, 12
        %v756 = vpop.permute.xlu0 %755
        %757 = vrot.lane.b32.xlu0 %v276, 12
        %v758 = vpop.permute.xlu0 %757
        %759 = vrot.lane.b32.xlu0 %v277, 12
        %v760 = vpop.permute.xlu0 %759
        %761 = vrot.lane.b32.xlu0 %v279, 12
        %v762 = vpop.permute.xlu0 %761
        %763 = vrot.lane.b32.xlu0 %v280, 12
        %v764 = vpop.permute.xlu0 %763
        %765 = vrot.lane.b32.xlu0 %v282, 12
        %v766 = vpop.permute.xlu0 %765
        %767 = vrot.lane.b32.xlu0 %v283, 12
        %v768 = vpop.permute.xlu0 %767
        %769 = vrot.lane.b32.xlu0 %v285, 12
        %v770 = vpop.permute.xlu0 %769
        %771 = vrot.lane.b32.xlu0 %v286, 12
        %v772 = vpop.permute.xlu0 %771
        %773 = vrot.lane.b32.xlu0 %v288, 12
        %v774 = vpop.permute.xlu0 %773
        %775 = vrot.lane.b32.xlu0 %v289, 12
        %v776 = vpop.permute.xlu0 %775
        %777 = vrot.lane.b32.xlu0 %v291, 12
        %v778 = vpop.permute.xlu0 %777
        %779 = vrot.lane.b32.xlu0 %v292, 12
        %v780 = vpop.permute.xlu0 %779
        %781 = vrot.lane.b32.xlu0 %v294, 12
        %v782 = vpop.permute.xlu0 %781
        %783 = vrot.lane.b32.xlu0 %v295, 12
        %v784 = vpop.permute.xlu0 %783
        %785 = vrot.lane.b32.xlu0 %v297, 12
        %v786 = vpop.permute.xlu0 %785
        %787 = vrot.lane.b32.xlu0 %v298, 12
        %v788 = vpop.permute.xlu0 %787
        %789 = vrot.lane.b32.xlu0 %v300, 12
        %v790 = vpop.permute.xlu0 %789
        %791 = vrot.lane.b32.xlu0 %v301, 12
        %v792 = vpop.permute.xlu0 %791
        %793 = vrot.lane.b32.xlu0 %v303, 12
        %v794 = vpop.permute.xlu0 %793
        %795 = vrot.lane.b32.xlu0 %v304, 12
        %v796 = vpop.permute.xlu0 %795
        %797 = vrot.lane.b32.xlu0 %v306, 12
        %v798 = vpop.permute.xlu0 %797
        %799 = vrot.lane.b32.xlu0 %v307, 12
        %v800 = vpop.permute.xlu0 %799
        %801 = vrot.lane.b32.xlu0 %v309, 12
        %v802 = vpop.permute.xlu0 %801
        %803 = vrot.lane.b32.xlu0 %v310, 12
        %v804 = vpop.permute.xlu0 %803
        %805 = vrot.lane.b32.xlu0 %v312, 12
        %v806 = vpop.permute.xlu0 %805
        %807 = vrot.lane.b32.xlu0 %v313, 12
        %v808 = vpop.permute.xlu0 %807
        %809 = vrot.lane.b32.xlu0 %v315, 12
        %v810 = vpop.permute.xlu0 %809
        %811 = vrot.lane.b32.xlu0 %v316, 12
        %v812 = vpop.permute.xlu0 %811
        %845 = vrot.lane.b32.xlu0 %v377, 16
        %v846 = vpop.permute.xlu0 %845
        %847 = vrot.lane.b32.xlu0 %v379, 16
        %v848 = vpop.permute.xlu0 %847
        %849 = vrot.lane.b32.xlu0 %v382, 16
        %v850 = vpop.permute.xlu0 %849
        %851 = vrot.lane.b32.xlu0 %v384, 16
        %v852 = vpop.permute.xlu0 %851
        %853 = vrot.lane.b32.xlu0 %v387, 16
        %v854 = vpop.permute.xlu0 %853
        %855 = vrot.lane.b32.xlu0 %v389, 16
        %v856 = vpop.permute.xlu0 %855
        %857 = vrot.lane.b32.xlu0 %v392, 16
        %v858 = vpop.permute.xlu0 %857
        %859 = vrot.lane.b32.xlu0 %v394, 16
        %v860 = vpop.permute.xlu0 %859
        %861 = vrot.lane.b32.xlu0 %v397, 16
        %v862 = vpop.permute.xlu0 %861
        %863 = vrot.lane.b32.xlu0 %v399, 16
        %v864 = vpop.permute.xlu0 %863
        %865 = vrot.lane.b32.xlu0 %v402, 16
        %v866 = vpop.permute.xlu0 %865
        %867 = vrot.lane.b32.xlu0 %v404, 16
        %v868 = vpop.permute.xlu0 %867
        %869 = vrot.lane.b32.xlu0 %v407, 16
        %v870 = vpop.permute.xlu0 %869
        %871 = vrot.lane.b32.xlu0 %v409, 16
        %v872 = vpop.permute.xlu0 %871
        %873 = vrot.lane.b32.xlu0 %v412, 16
        %v874 = vpop.permute.xlu0 %873
        %875 = vrot.lane.b32.xlu0 %v414, 16
        %v876 = vpop.permute.xlu0 %875
        %877 = vrot.lane.b32.xlu0 %v417, 16
        %v878 = vpop.permute.xlu0 %877
        %879 = vrot.lane.b32.xlu0 %v419, 16
        %v880 = vpop.permute.xlu0 %879
        %881 = vrot.lane.b32.xlu0 %v422, 16
        %v882 = vpop.permute.xlu0 %881
        %883 = vrot.lane.b32.xlu0 %v424, 16
        %v884 = vpop.permute.xlu0 %883
        %885 = vrot.lane.b32.xlu0 %v427, 16
        %v886 = vpop.permute.xlu0 %885
        %887 = vrot.lane.b32.xlu0 %v429, 16
        %v888 = vpop.permute.xlu0 %887
        %889 = vrot.lane.b32.xlu0 %v432, 16
        %v890 = vpop.permute.xlu0 %889
        %891 = vrot.lane.b32.xlu0 %v434, 16
        %v892 = vpop.permute.xlu0 %891
        %893 = vrot.lane.b32.xlu0 %v437, 16
        %v894 = vpop.permute.xlu0 %893
        %895 = vrot.lane.b32.xlu0 %v439, 16
        %v896 = vpop.permute.xlu0 %895
        %897 = vrot.lane.b32.xlu0 %v442, 16
        %v898 = vpop.permute.xlu0 %897
        %899 = vrot.lane.b32.xlu0 %v444, 16
        %v900 = vpop.permute.xlu0 %899
        %901 = vrot.lane.b32.xlu0 %v447, 16
        %v902 = vpop.permute.xlu0 %901
        %903 = vrot.lane.b32.xlu0 %v449, 16
        %v904 = vpop.permute.xlu0 %903
        %905 = vrot.lane.b32.xlu0 %v536, 16
        %v906 = vpop.permute.xlu0 %905
        %907 = vrot.lane.b32.xlu0 %v538, 16
        %v908 = vpop.permute.xlu0 %907
        %941 = vrot.lane.b32.xlu0 %v458, 20
        %v942 = vpop.permute.xlu0 %941
        %943 = vrot.lane.b32.xlu0 %v460, 20
        %v944 = vpop.permute.xlu0 %943
        %945 = vrot.lane.b32.xlu0 %v463, 20
        %v946 = vpop.permute.xlu0 %945
        %947 = vrot.lane.b32.xlu0 %v465, 20
        %v948 = vpop.permute.xlu0 %947
        %949 = vrot.lane.b32.xlu0 %v468, 20
        %v950 = vpop.permute.xlu0 %949
        %951 = vrot.lane.b32.xlu0 %v470, 20
        %v952 = vpop.permute.xlu0 %951
        %953 = vrot.lane.b32.xlu0 %v473, 20
        %v954 = vpop.permute.xlu0 %953
        %955 = vrot.lane.b32.xlu0 %v475, 20
        %v956 = vpop.permute.xlu0 %955
        %957 = vrot.lane.b32.xlu0 %v478, 20
        %v958 = vpop.permute.xlu0 %957
        %959 = vrot.lane.b32.xlu0 %v480, 20
        %v960 = vpop.permute.xlu0 %959
        %961 = vrot.lane.b32.xlu0 %v483, 20
        %v962 = vpop.permute.xlu0 %961
        %963 = vrot.lane.b32.xlu0 %v485, 20
        %v964 = vpop.permute.xlu0 %963
        %965 = vrot.lane.b32.xlu0 %v488, 20
        %v966 = vpop.permute.xlu0 %965
        %967 = vrot.lane.b32.xlu0 %v490, 20
        %v968 = vpop.permute.xlu0 %967
        %969 = vrot.lane.b32.xlu0 %v493, 20
        %v970 = vpop.permute.xlu0 %969
        %971 = vrot.lane.b32.xlu0 %v495, 20
        %v972 = vpop.permute.xlu0 %971
        %973 = vrot.lane.b32.xlu0 %v498, 20
        %v974 = vpop.permute.xlu0 %973
        %975 = vrot.lane.b32.xlu0 %v500, 20
        %v976 = vpop.permute.xlu0 %975
        %977 = vrot.lane.b32.xlu0 %v503, 20
        %v978 = vpop.permute.xlu0 %977
        %979 = vrot.lane.b32.xlu0 %v505, 20
        %v980 = vpop.permute.xlu0 %979
        %981 = vrot.lane.b32.xlu0 %v508, 20
        %v982 = vpop.permute.xlu0 %981
        %983 = vrot.lane.b32.xlu0 %v510, 20
        %v984 = vpop.permute.xlu0 %983
        %985 = vrot.lane.b32.xlu0 %v513, 20
        %v986 = vpop.permute.xlu0 %985
        %987 = vrot.lane.b32.xlu0 %v515, 20
        %v988 = vpop.permute.xlu0 %987
        %989 = vrot.lane.b32.xlu0 %v518, 20
        %v990 = vpop.permute.xlu0 %989
        %991 = vrot.lane.b32.xlu0 %v520, 20
        %v992 = vpop.permute.xlu0 %991
        %993 = vrot.lane.b32.xlu0 %v523, 20
        %v994 = vpop.permute.xlu0 %993
        %995 = vrot.lane.b32.xlu0 %v525, 20
        %v996 = vpop.permute.xlu0 %995
        %997 = vrot.lane.b32.xlu0 %v528, 20
        %v998 = vpop.permute.xlu0 %997
        %999 = vrot.lane.b32.xlu0 %v530, 20
        %v1000 = vpop.permute.xlu0 %999
        %1001 = vrot.lane.b32.xlu0 %v541, 20
        %v1002 = vpop.permute.xlu0 %1001
        %1003 = vrot.lane.b32.xlu0 %v543, 20
        %v1004 = vpop.permute.xlu0 %1003
        %1037 = vrot.lane.b32.xlu0 %v273, 24
        %v1038 = vpop.permute.xlu0 %1037
        %1039 = vrot.lane.b32.xlu0 %v274, 24
        %v1040 = vpop.permute.xlu0 %1039
        %1041 = vrot.lane.b32.xlu0 %v276, 24
        %v1042 = vpop.permute.xlu0 %1041
        %1043 = vrot.lane.b32.xlu0 %v277, 24
        %v1044 = vpop.permute.xlu0 %1043
        %1045 = vrot.lane.b32.xlu0 %v279, 24
        %v1046 = vpop.permute.xlu0 %1045
        %1047 = vrot.lane.b32.xlu0 %v280, 24
        %v1048 = vpop.permute.xlu0 %1047
        %1049 = vrot.lane.b32.xlu0 %v282, 24
        %v1050 = vpop.permute.xlu0 %1049
        %1051 = vrot.lane.b32.xlu0 %v283, 24
        %v1052 = vpop.permute.xlu0 %1051
        %1053 = vrot.lane.b32.xlu0 %v285, 24
        %v1054 = vpop.permute.xlu0 %1053
        %1055 = vrot.lane.b32.xlu0 %v286, 24
        %v1056 = vpop.permute.xlu0 %1055
        %1057 = vrot.lane.b32.xlu0 %v288, 24
        %v1058 = vpop.permute.xlu0 %1057
        %1059 = vrot.lane.b32.xlu0 %v289, 24
        %v1060 = vpop.permute.xlu0 %1059
        %1061 = vrot.lane.b32.xlu0 %v291, 24
        %v1062 = vpop.permute.xlu0 %1061
        %1063 = vrot.lane.b32.xlu0 %v292, 24
        %v1064 = vpop.permute.xlu0 %1063
        %1065 = vrot.lane.b32.xlu0 %v294, 24
        %v1066 = vpop.permute.xlu0 %1065
        %1067 = vrot.lane.b32.xlu0 %v295, 24
        %v1068 = vpop.permute.xlu0 %1067
        %1069 = vrot.lane.b32.xlu0 %v297, 24
        %v1070 = vpop.permute.xlu0 %1069
        %1071 = vrot.lane.b32.xlu0 %v298, 24
        %v1072 = vpop.permute.xlu0 %1071
        %1073 = vrot.lane.b32.xlu0 %v300, 24
        %v1074 = vpop.permute.xlu0 %1073
        %1075 = vrot.lane.b32.xlu0 %v301, 24
        %v1076 = vpop.permute.xlu0 %1075
        %1077 = vrot.lane.b32.xlu0 %v303, 24
        %v1078 = vpop.permute.xlu0 %1077
        %1079 = vrot.lane.b32.xlu0 %v304, 24
        %v1080 = vpop.permute.xlu0 %1079
        %1081 = vrot.lane.b32.xlu0 %v306, 24
        %v1082 = vpop.permute.xlu0 %1081
        %1083 = vrot.lane.b32.xlu0 %v307, 24
        %v1084 = vpop.permute.xlu0 %1083
        %1085 = vrot.lane.b32.xlu0 %v309, 24
        %v1086 = vpop.permute.xlu0 %1085
        %1087 = vrot.lane.b32.xlu0 %v310, 24
        %v1088 = vpop.permute.xlu0 %1087
        %1089 = vrot.lane.b32.xlu0 %v312, 24
        %v1090 = vpop.permute.xlu0 %1089
        %1091 = vrot.lane.b32.xlu0 %v313, 24
        %v1092 = vpop.permute.xlu0 %1091
        %1093 = vrot.lane.b32.xlu0 %v315, 24
        %v1094 = vpop.permute.xlu0 %1093
        %1095 = vrot.lane.b32.xlu0 %v316, 24
        %v1096 = vpop.permute.xlu0 %1095
        %1097 = vrot.lane.b32.xlu0 %v318, 24
        %v1098 = vpop.permute.xlu0 %1097
        %1099 = vrot.lane.b32.xlu0 %v319, 24
        %v1100 = vpop.permute.xlu0 %1099
        %1133 = vrot.lane.b32.xlu0 %v382, 28
        %v1134 = vpop.permute.xlu0 %1133
        %1135 = vrot.lane.b32.xlu0 %v384, 28
        %v1136 = vpop.permute.xlu0 %1135
        %1137 = vrot.lane.b32.xlu0 %v387, 28
        %v1138 = vpop.permute.xlu0 %1137
        %1139 = vrot.lane.b32.xlu0 %v389, 28
        %v1140 = vpop.permute.xlu0 %1139
        %1141 = vrot.lane.b32.xlu0 %v392, 28
        %v1142 = vpop.permute.xlu0 %1141
        %1143 = vrot.lane.b32.xlu0 %v394, 28
        %v1144 = vpop.permute.xlu0 %1143
        %1145 = vrot.lane.b32.xlu0 %v397, 28
        %v1146 = vpop.permute.xlu0 %1145
        %1147 = vrot.lane.b32.xlu0 %v399, 28
        %v1148 = vpop.permute.xlu0 %1147
        %1149 = vrot.lane.b32.xlu0 %v402, 28
        %v1150 = vpop.permute.xlu0 %1149
        %1151 = vrot.lane.b32.xlu0 %v404, 28
        %v1152 = vpop.permute.xlu0 %1151
        %1153 = vrot.lane.b32.xlu0 %v407, 28
        %v1154 = vpop.permute.xlu0 %1153
        %1155 = vrot.lane.b32.xlu0 %v409, 28
        %v1156 = vpop.permute.xlu0 %1155
        %1157 = vrot.lane.b32.xlu0 %v412, 28
        %v1158 = vpop.permute.xlu0 %1157
        %1159 = vrot.lane.b32.xlu0 %v414, 28
        %v1160 = vpop.permute.xlu0 %1159
        %1161 = vrot.lane.b32.xlu0 %v417, 28
        %v1162 = vpop.permute.xlu0 %1161
        %1163 = vrot.lane.b32.xlu0 %v419, 28
        %v1164 = vpop.permute.xlu0 %1163
        %1165 = vrot.lane.b32.xlu0 %v422, 28
        %v1166 = vpop.permute.xlu0 %1165
        %1167 = vrot.lane.b32.xlu0 %v424, 28
        %v1168 = vpop.permute.xlu0 %1167
        %1169 = vrot.lane.b32.xlu0 %v427, 28
        %v1170 = vpop.permute.xlu0 %1169
        %1171 = vrot.lane.b32.xlu0 %v429, 28
        %v1172 = vpop.permute.xlu0 %1171
        %1173 = vrot.lane.b32.xlu0 %v432, 28
        %v1174 = vpop.permute.xlu0 %1173
        %1175 = vrot.lane.b32.xlu0 %v434, 28
        %v1176 = vpop.permute.xlu0 %1175
        %1177 = vrot.lane.b32.xlu0 %v437, 28
        %v1178 = vpop.permute.xlu0 %1177
        %1179 = vrot.lane.b32.xlu0 %v439, 28
        %v1180 = vpop.permute.xlu0 %1179
        %1181 = vrot.lane.b32.xlu0 %v442, 28
        %v1182 = vpop.permute.xlu0 %1181
        %1183 = vrot.lane.b32.xlu0 %v444, 28
        %v1184 = vpop.permute.xlu0 %1183
        %1185 = vrot.lane.b32.xlu0 %v447, 28
        %v1186 = vpop.permute.xlu0 %1185
        %1187 = vrot.lane.b32.xlu0 %v449, 28
        %v1188 = vpop.permute.xlu0 %1187
        %1189 = vrot.lane.b32.xlu0 %v536, 28
        %v1190 = vpop.permute.xlu0 %1189
        %1191 = vrot.lane.b32.xlu0 %v538, 28
        %v1192 = vpop.permute.xlu0 %1191
        %1193 = vrot.lane.b32.xlu0 %v549, 28
        %v1194 = vpop.permute.xlu0 %1193
        %1195 = vrot.lane.b32.xlu0 %v551, 28
        %v1196 = vpop.permute.xlu0 %1195
        %1229 = vrot.lane.b32.xlu0 %v463, 32
        %v1230 = vpop.permute.xlu0 %1229
        %1231 = vrot.lane.b32.xlu0 %v465, 32
        %v1232 = vpop.permute.xlu0 %1231
        %1233 = vrot.lane.b32.xlu0 %v468, 32
        %v1234 = vpop.permute.xlu0 %1233
        %1235 = vrot.lane.b32.xlu0 %v470, 32
        %v1236 = vpop.permute.xlu0 %1235
        %1237 = vrot.lane.b32.xlu0 %v473, 32
        %v1238 = vpop.permute.xlu0 %1237
        %1239 = vrot.lane.b32.xlu0 %v475, 32
        %v1240 = vpop.permute.xlu0 %1239
        %1241 = vrot.lane.b32.xlu0 %v478, 32
        %v1242 = vpop.permute.xlu0 %1241
        %1243 = vrot.lane.b32.xlu0 %v480, 32
        %v1244 = vpop.permute.xlu0 %1243
        %1245 = vrot.lane.b32.xlu0 %v483, 32
        %v1246 = vpop.permute.xlu0 %1245
        %1247 = vrot.lane.b32.xlu0 %v485, 32
        %v1248 = vpop.permute.xlu0 %1247
        %1249 = vrot.lane.b32.xlu0 %v488, 32
        %v1250 = vpop.permute.xlu0 %1249
        %1251 = vrot.lane.b32.xlu0 %v490, 32
        %v1252 = vpop.permute.xlu0 %1251
        %1253 = vrot.lane.b32.xlu0 %v493, 32
        %v1254 = vpop.permute.xlu0 %1253
        %1255 = vrot.lane.b32.xlu0 %v495, 32
        %v1256 = vpop.permute.xlu0 %1255
        %1257 = vrot.lane.b32.xlu0 %v498, 32
        %v1258 = vpop.permute.xlu0 %1257
        %1259 = vrot.lane.b32.xlu0 %v500, 32
        %v1260 = vpop.permute.xlu0 %1259
        %1261 = vrot.lane.b32.xlu0 %v503, 32
        %v1262 = vpop.permute.xlu0 %1261
        %1263 = vrot.lane.b32.xlu0 %v505, 32
        %v1264 = vpop.permute.xlu0 %1263
        %1265 = vrot.lane.b32.xlu0 %v508, 32
        %v1266 = vpop.permute.xlu0 %1265
        %1267 = vrot.lane.b32.xlu0 %v510, 32
        %v1268 = vpop.permute.xlu0 %1267
        %1269 = vrot.lane.b32.xlu0 %v513, 32
        %v1270 = vpop.permute.xlu0 %1269
        %1271 = vrot.lane.b32.xlu0 %v515, 32
        %v1272 = vpop.permute.xlu0 %1271
        %1273 = vrot.lane.b32.xlu0 %v518, 32
        %v1274 = vpop.permute.xlu0 %1273
        %1275 = vrot.lane.b32.xlu0 %v520, 32
        %v1276 = vpop.permute.xlu0 %1275
        %1277 = vrot.lane.b32.xlu0 %v523, 32
        %v1278 = vpop.permute.xlu0 %1277
        %1279 = vrot.lane.b32.xlu0 %v525, 32
        %v1280 = vpop.permute.xlu0 %1279
        %1281 = vrot.lane.b32.xlu0 %v528, 32
        %v1282 = vpop.permute.xlu0 %1281
        %1283 = vrot.lane.b32.xlu0 %v530, 32
        %v1284 = vpop.permute.xlu0 %1283
        %1285 = vrot.lane.b32.xlu0 %v541, 32
        %v1286 = vpop.permute.xlu0 %1285
        %1287 = vrot.lane.b32.xlu0 %v543, 32
        %v1288 = vpop.permute.xlu0 %1287
        %1289 = vrot.lane.b32.xlu0 %v554, 32
        %v1290 = vpop.permute.xlu0 %1289
        %1291 = vrot.lane.b32.xlu0 %v556, 32
        %v1292 = vpop.permute.xlu0 %1291
        %vm1325 = vcmask 31744
        %v1326 = vsel %vm1325, %v267, %v558
        %v1327 = vsel %vm1325, %v268, %v560
        %v1328 = vsel %vm1325, %v270, %v562
        %v1329 = vsel %vm1325, %v271, %v564
        %v1330 = vsel %vm1325, %v273, %v566
        %v1331 = vsel %vm1325, %v274, %v568
        %v1332 = vsel %vm1325, %v276, %v570
        %v1333 = vsel %vm1325, %v277, %v572
        %v1334 = vsel %vm1325, %v279, %v574
        %v1335 = vsel %vm1325, %v280, %v576
        %v1336 = vsel %vm1325, %v282, %v578
        %v1337 = vsel %vm1325, %v283, %v580
        %v1338 = vsel %vm1325, %v285, %v582
        %v1339 = vsel %vm1325, %v286, %v584
        %v1340 = vsel %vm1325, %v288, %v586
        %v1341 = vsel %vm1325, %v289, %v588
        %v1342 = vsel %vm1325, %v291, %v590
        %v1343 = vsel %vm1325, %v292, %v592
        %v1344 = vsel %vm1325, %v294, %v594
        %v1345 = vsel %vm1325, %v295, %v596
        %v1346 = vsel %vm1325, %v297, %v598
        %v1347 = vsel %vm1325, %v298, %v600
        %v1348 = vsel %vm1325, %v300, %v602
        %v1349 = vsel %vm1325, %v301, %v604
        %v1350 = vsel %vm1325, %v303, %v606
        %v1351 = vsel %vm1325, %v304, %v608
        %v1352 = vsel %vm1325, %v306, %v610
        %v1353 = vsel %vm1325, %v307, %v612
        %v1354 = vsel %vm1325, %v309, %v614
        %v1355 = vsel %vm1325, %v310, %v616
        %v1356 = vsel %vm1325, %v312, %v618
        %v1357 = vsel %vm1325, %v313, %v620
        %vm1358 = vcmask 64512
        %v1359 = vsel %vm1358, %v1326, %v654
        %v1360 = vsel %vm1358, %v1327, %v656
        %v1361 = vsel %vm1358, %v1328, %v658
        %v1362 = vsel %vm1358, %v1329, %v660
        %v1363 = vsel %vm1358, %v1330, %v662
        %v1364 = vsel %vm1358, %v1331, %v664
        %v1365 = vsel %vm1358, %v1332, %v666
        %v1366 = vsel %vm1358, %v1333, %v668
        %v1367 = vsel %vm1358, %v1334, %v670
        %v1368 = vsel %vm1358, %v1335, %v672
        %v1369 = vsel %vm1358, %v1336, %v674
        %v1370 = vsel %vm1358, %v1337, %v676
        %v1371 = vsel %vm1358, %v1338, %v678
        %v1372 = vsel %vm1358, %v1339, %v680
        %v1373 = vsel %vm1358, %v1340, %v682
        %v1374 = vsel %vm1358, %v1341, %v684
        %v1375 = vsel %vm1358, %v1342, %v686
        %v1376 = vsel %vm1358, %v1343, %v688
        %v1377 = vsel %vm1358, %v1344, %v690
        %v1378 = vsel %vm1358, %v1345, %v692
        %v1379 = vsel %vm1358, %v1346, %v694
        %v1380 = vsel %vm1358, %v1347, %v696
        %v1381 = vsel %vm1358, %v1348, %v698
        %v1382 = vsel %vm1358, %v1349, %v700
        %v1383 = vsel %vm1358, %v1350, %v702
        %v1384 = vsel %vm1358, %v1351, %v704
        %v1385 = vsel %vm1358, %v1352, %v706
        %v1386 = vsel %vm1358, %v1353, %v708
        %v1387 = vsel %vm1358, %v1354, %v710
        %v1388 = vsel %vm1358, %v1355, %v712
        %v1389 = vsel %vm1358, %v1356, %v714
        %v1390 = vsel %vm1358, %v1357, %v716
        %vm1391 = vcmask 97280
        %v1392 = vsel %vm1391, %v1359, %v750
        %v1393 = vsel %vm1391, %v1360, %v752
        %v1394 = vsel %vm1391, %v1361, %v754
        %v1395 = vsel %vm1391, %v1362, %v756
        %v1396 = vsel %vm1391, %v1363, %v758
        %v1397 = vsel %vm1391, %v1364, %v760
        %v1398 = vsel %vm1391, %v1365, %v762
        %v1399 = vsel %vm1391, %v1366, %v764
        %v1400 = vsel %vm1391, %v1367, %v766
        %v1401 = vsel %vm1391, %v1368, %v768
        %v1402 = vsel %vm1391, %v1369, %v770
        %v1403 = vsel %vm1391, %v1370, %v772
        %v1404 = vsel %vm1391, %v1371, %v774
        %v1405 = vsel %vm1391, %v1372, %v776
        %v1406 = vsel %vm1391, %v1373, %v778
        %v1407 = vsel %vm1391, %v1374, %v780
        %v1408 = vsel %vm1391, %v1375, %v782
        %v1409 = vsel %vm1391, %v1376, %v784
        %v1410 = vsel %vm1391, %v1377, %v786
        %v1411 = vsel %vm1391, %v1378, %v788
        %v1412 = vsel %vm1391, %v1379, %v790
        %v1413 = vsel %vm1391, %v1380, %v792
        %v1414 = vsel %vm1391, %v1381, %v794
        %v1415 = vsel %vm1391, %v1382, %v796
        %v1416 = vsel %vm1391, %v1383, %v798
        %v1417 = vsel %vm1391, %v1384, %v800
        %v1418 = vsel %vm1391, %v1385, %v802
        %v1419 = vsel %vm1391, %v1386, %v804
        %v1420 = vsel %vm1391, %v1387, %v806
        %v1421 = vsel %vm1391, %v1388, %v808
        %v1422 = vsel %vm1391, %v1389, %v810
        %v1423 = vsel %vm1391, %v1390, %v812
        %vm1424 = vcmask 130048
        %v1425 = vsel %vm1424, %v1392, %v846
        %v1426 = vsel %vm1424, %v1393, %v848
        %v1427 = vsel %vm1424, %v1394, %v850
        %v1428 = vsel %vm1424, %v1395, %v852
        %v1429 = vsel %vm1424, %v1396, %v854
        %v1430 = vsel %vm1424, %v1397, %v856
        %v1431 = vsel %vm1424, %v1398, %v858
        %v1432 = vsel %vm1424, %v1399, %v860
        %v1433 = vsel %vm1424, %v1400, %v862
        %v1434 = vsel %vm1424, %v1401, %v864
        %v1435 = vsel %vm1424, %v1402, %v866
        %v1436 = vsel %vm1424, %v1403, %v868
        %v1437 = vsel %vm1424, %v1404, %v870
        %v1438 = vsel %vm1424, %v1405, %v872
        %v1439 = vsel %vm1424, %v1406, %v874
        %v1440 = vsel %vm1424, %v1407, %v876
        %v1441 = vsel %vm1424, %v1408, %v878
        %v1442 = vsel %vm1424, %v1409, %v880
        %v1443 = vsel %vm1424, %v1410, %v882
        %v1444 = vsel %vm1424, %v1411, %v884
        %v1445 = vsel %vm1424, %v1412, %v886
        %v1446 = vsel %vm1424, %v1413, %v888
        %v1447 = vsel %vm1424, %v1414, %v890
        %v1448 = vsel %vm1424, %v1415, %v892
        %v1449 = vsel %vm1424, %v1416, %v894
        %v1450 = vsel %vm1424, %v1417, %v896
        %v1451 = vsel %vm1424, %v1418, %v898
        %v1452 = vsel %vm1424, %v1419, %v900
        %v1453 = vsel %vm1424, %v1420, %v902
        %v1454 = vsel %vm1424, %v1421, %v904
        %v1455 = vsel %vm1424, %v1422, %v906
        %v1456 = vsel %vm1424, %v1423, %v908
        %vm1457 = vcmask 162816
        %v1458 = vsel %vm1457, %v1425, %v942
        %v1459 = vsel %vm1457, %v1426, %v944
        %v1460 = vsel %vm1457, %v1427, %v946
        %v1461 = vsel %vm1457, %v1428, %v948
        %v1462 = vsel %vm1457, %v1429, %v950
        %v1463 = vsel %vm1457, %v1430, %v952
        %v1464 = vsel %vm1457, %v1431, %v954
        %v1465 = vsel %vm1457, %v1432, %v956
        %v1466 = vsel %vm1457, %v1433, %v958
        %v1467 = vsel %vm1457, %v1434, %v960
        %v1468 = vsel %vm1457, %v1435, %v962
        %v1469 = vsel %vm1457, %v1436, %v964
        %v1470 = vsel %vm1457, %v1437, %v966
        %v1471 = vsel %vm1457, %v1438, %v968
        %v1472 = vsel %vm1457, %v1439, %v970
        %v1473 = vsel %vm1457, %v1440, %v972
        %v1474 = vsel %vm1457, %v1441, %v974
        %v1475 = vsel %vm1457, %v1442, %v976
        %v1476 = vsel %vm1457, %v1443, %v978
        %v1477 = vsel %vm1457, %v1444, %v980
        %v1478 = vsel %vm1457, %v1445, %v982
        %v1479 = vsel %vm1457, %v1446, %v984
        %v1480 = vsel %vm1457, %v1447, %v986
        %v1481 = vsel %vm1457, %v1448, %v988
        %v1482 = vsel %vm1457, %v1449, %v990
        %v1483 = vsel %vm1457, %v1450, %v992
        %v1484 = vsel %vm1457, %v1451, %v994
        %v1485 = vsel %vm1457, %v1452, %v996
        %v1486 = vsel %vm1457, %v1453, %v998
        %v1487 = vsel %vm1457, %v1454, %v1000
        %v1488 = vsel %vm1457, %v1455, %v1002
        %v1489 = vsel %vm1457, %v1456, %v1004
        %vm1490 = vcmask 195584
        %v1491 = vsel %vm1490, %v1458, %v1038
        %v1492 = vsel %vm1490, %v1459, %v1040
        %v1493 = vsel %vm1490, %v1460, %v1042
        %v1494 = vsel %vm1490, %v1461, %v1044
        %v1495 = vsel %vm1490, %v1462, %v1046
        %v1496 = vsel %vm1490, %v1463, %v1048
        %v1497 = vsel %vm1490, %v1464, %v1050
        %v1498 = vsel %vm1490, %v1465, %v1052
        %v1499 = vsel %vm1490, %v1466, %v1054
        %v1500 = vsel %vm1490, %v1467, %v1056
        %v1501 = vsel %vm1490, %v1468, %v1058
        %v1502 = vsel %vm1490, %v1469, %v1060
        %v1503 = vsel %vm1490, %v1470, %v1062
        %v1504 = vsel %vm1490, %v1471, %v1064
        %v1505 = vsel %vm1490, %v1472, %v1066
        %v1506 = vsel %vm1490, %v1473, %v1068
        %v1507 = vsel %vm1490, %v1474, %v1070
        %v1508 = vsel %vm1490, %v1475, %v1072
        %v1509 = vsel %vm1490, %v1476, %v1074
        %v1510 = vsel %vm1490, %v1477, %v1076
        %v1511 = vsel %vm1490, %v1478, %v1078
        %v1512 = vsel %vm1490, %v1479, %v1080
        %v1513 = vsel %vm1490, %v1480, %v1082
        %v1514 = vsel %vm1490, %v1481, %v1084
        %v1515 = vsel %vm1490, %v1482, %v1086
        %v1516 = vsel %vm1490, %v1483, %v1088
        %v1517 = vsel %vm1490, %v1484, %v1090
        %v1518 = vsel %vm1490, %v1485, %v1092
        %v1519 = vsel %vm1490, %v1486, %v1094
        %v1520 = vsel %vm1490, %v1487, %v1096
        %v1521 = vsel %vm1490, %v1488, %v1098
        %v1522 = vsel %vm1490, %v1489, %v1100
        %vm1523 = vcmask 228352
        %v1524 = vsel %vm1523, %v1491, %v1134
        %v1525 = vsel %vm1523, %v1492, %v1136
        %v1526 = vsel %vm1523, %v1493, %v1138
        %v1527 = vsel %vm1523, %v1494, %v1140
        %v1528 = vsel %vm1523, %v1495, %v1142
        %v1529 = vsel %vm1523, %v1496, %v1144
        %v1530 = vsel %vm1523, %v1497, %v1146
        %v1531 = vsel %vm1523, %v1498, %v1148
        %v1532 = vsel %vm1523, %v1499, %v1150
        %v1533 = vsel %vm1523, %v1500, %v1152
        %v1534 = vsel %vm1523, %v1501, %v1154
        %v1535 = vsel %vm1523, %v1502, %v1156
        %v1536 = vsel %vm1523, %v1503, %v1158
        %v1537 = vsel %vm1523, %v1504, %v1160
        %v1538 = vsel %vm1523, %v1505, %v1162
        %v1539 = vsel %vm1523, %v1506, %v1164
        %v1540 = vsel %vm1523, %v1507, %v1166
        %v1541 = vsel %vm1523, %v1508, %v1168
        %v1542 = vsel %vm1523, %v1509, %v1170
        %v1543 = vsel %vm1523, %v1510, %v1172
        %v1544 = vsel %vm1523, %v1511, %v1174
        %v1545 = vsel %vm1523, %v1512, %v1176
        %v1546 = vsel %vm1523, %v1513, %v1178
        %v1547 = vsel %vm1523, %v1514, %v1180
        %v1548 = vsel %vm1523, %v1515, %v1182
        %v1549 = vsel %vm1523, %v1516, %v1184
        %v1550 = vsel %vm1523, %v1517, %v1186
        %v1551 = vsel %vm1523, %v1518, %v1188
        %v1552 = vsel %vm1523, %v1519, %v1190
        %v1553 = vsel %vm1523, %v1520, %v1192
        %v1554 = vsel %vm1523, %v1521, %v1194
        %v1555 = vsel %vm1523, %v1522, %v1196
        %vm1556 = vcmask 261120
        %v1557 = vsel %vm1556, %v1524, %v1230
        %v1558 = vsel %vm1556, %v1525, %v1232
        %v1559 = vsel %vm1556, %v1526, %v1234
        %v1560 = vsel %vm1556, %v1527, %v1236
        %v1561 = vsel %vm1556, %v1528, %v1238
        %v1562 = vsel %vm1556, %v1529, %v1240
        %v1563 = vsel %vm1556, %v1530, %v1242
        %v1564 = vsel %vm1556, %v1531, %v1244
        %v1565 = vsel %vm1556, %v1532, %v1246
        %v1566 = vsel %vm1556, %v1533, %v1248
        %v1567 = vsel %vm1556, %v1534, %v1250
        %v1568 = vsel %vm1556, %v1535, %v1252
        %v1569 = vsel %vm1556, %v1536, %v1254
        %v1570 = vsel %vm1556, %v1537, %v1256
        %v1571 = vsel %vm1556, %v1538, %v1258
        %v1572 = vsel %vm1556, %v1539, %v1260
        %v1573 = vsel %vm1556, %v1540, %v1262
        %v1574 = vsel %vm1556, %v1541, %v1264
        %v1575 = vsel %vm1556, %v1542, %v1266
        %v1576 = vsel %vm1556, %v1543, %v1268
        %v1577 = vsel %vm1556, %v1544, %v1270
        %v1578 = vsel %vm1556, %v1545, %v1272
        %v1579 = vsel %vm1556, %v1546, %v1274
        %v1580 = vsel %vm1556, %v1547, %v1276
        %v1581 = vsel %vm1556, %v1548, %v1278
        %v1582 = vsel %vm1556, %v1549, %v1280
        %v1583 = vsel %vm1556, %v1550, %v1282
        %v1584 = vsel %vm1556, %v1551, %v1284
        %v1585 = vsel %vm1556, %v1552, %v1286
        %v1586 = vsel %vm1556, %v1553, %v1288
        %v1587 = vsel %vm1556, %v1554, %v1290
        %v1588 = vsel %vm1556, %v1555, %v1292
        %v1589 = vpack.c.bf16 %v1558, %v1557
        %v1590 = vpack.c.bf16 %v1560, %v1559
        %v1591 = vpack.c.bf16 %v1562, %v1561
        %v1592 = vpack.c.bf16 %v1564, %v1563
        %v1593 = vpack.c.bf16 %v1566, %v1565
        %v1594 = vpack.c.bf16 %v1568, %v1567
        %v1595 = vpack.c.bf16 %v1570, %v1569
        %v1596 = vpack.c.bf16 %v1572, %v1571
        %v1597 = vpack.c.bf16 %v1574, %v1573
        %v1598 = vpack.c.bf16 %v1576, %v1575
        %v1599 = vpack.c.bf16 %v1578, %v1577
        %v1600 = vpack.c.bf16 %v1580, %v1579
        %v1601 = vpack.c.bf16 %v1582, %v1581
        %v1602 = vpack.c.bf16 %v1584, %v1583
        %v1603 = vpack.c.bf16 %v1586, %v1585
        %v1604 = vpack.c.bf16 %v1588, %v1587
        %v1605 = vld [vmem:[%s1] sm:$0xf]
        %v1606 = vld [vmem:[%s1 + $0x4] sm:$0xf]
        %v1607 = vld [vmem:[%s1 + $0x8] sm:$0xf]
        %v1608 = vld [vmem:[%s1 + $0xc] sm:$0xf]
        %v1609 = vld [vmem:[%s1 + $0x10] sm:$0x3]
        %v1615 = vunpack.c.l.b16 %v1605
        %v1616 = vunpack.c.l.b16 %v1606
        %v1617 = vunpack.c.l.b16 %v1607
        %v1618 = vunpack.c.l.b16 %v1608
        %v1619 = vunpack.c.l.b16 %v1609
        %v1620 = vpack.c.b16 %v1616, %v1615
        %v1621 = vpack.c.b16 %v1618, %v1617
        %v1622 = vpack.c.b16 %v1619, %v1619
        %vm1625 = vcmask 293888
        %v1627 = vsel %vm1625, %v1589, 0
        %v1630 = vsel %vm1625, %v1590, 0
        %v1633 = vsel %vm1625, %v1591, 0
        %v1636 = vsel %vm1625, %v1592, 0
        %v1639 = vsel %vm1625, %v1593, 0
        %v1642 = vsel %vm1625, %v1594, 0
        %v1645 = vsel %vm1625, %v1595, 0
        %v1648 = vsel %vm1625, %v1596, 0
        %v1651 = vsel %vm1625, %v1597, 0
        %v1654 = vsel %vm1625, %v1598, 0
        %v1657 = vsel %vm1625, %v1599, 0
        %v1660 = vsel %vm1625, %v1600, 0
        %v1663 = vsel %vm1625, %v1601, 0
        %v1666 = vsel %vm1625, %v1602, 0
        %v1669 = vsel %vm1625, %v1603, 0
        %v1672 = vsel %vm1625, %v1604, 0
        %vm1674 = vcmask 1041408
        %v1676 = vsel %vm1674, %v1622, 0
        %1678 = vmatprep.subr.bf16.mxu0 0
        %1679 = vmatpush1.bf16.msra.mxu0 %v1620
        %1680 = vmatprep.subr.bf16.mxu0 0
        %1681 = vmatpush1.bf16.msra.mxu0 %v1621
        %1682 = vmatprep.subr.bf16.mxu0 0
        %1683 = vmatpush1.bf16.msra.mxu0 %v1676
        %1684 = vmatprep.subr.bf16.mxu0 0
        %1685 = vmatpush1.bf16.msra.mxu0 0
        %1686 = vmatprep.subr.bf16.mxu0 0
        %1687 = vmatpush1.bf16.msra.mxu0 0
        %1688 = vmatprep.subr.bf16.mxu0 0
        %1689 = vmatpush1.bf16.msra.mxu0 0
        %1690 = vmatprep.subr.bf16.mxu0 0
        %1691 = vmatpush1.bf16.msra.mxu0 0
        %1692 = vmatprep.subr.bf16.mxu0 0
        %1693 = vmatpush1.bf16.msra.mxu0 0
        %1694 = vmatprep.subr.bf16.mxu0 0
        %1695 = vmatpush1.bf16.msra.mxu0 0
        %1696 = vmatprep.subr.bf16.mxu0 0
        %1697 = vmatpush1.bf16.msra.mxu0 0
        %1698 = vmatprep.subr.bf16.mxu0 0
        %1699 = vmatpush1.bf16.msra.mxu0 0
        %1700 = vmatprep.subr.bf16.mxu0 0
        %1701 = vmatpush1.bf16.msra.mxu0 0
        %1702 = vmatprep.subr.bf16.mxu0 0
        %1703 = vmatpush1.bf16.msra.mxu0 0
        %1704 = vmatprep.subr.bf16.mxu0 0
        %1705 = vmatpush1.bf16.msra.mxu0 0
        %1706 = vmatprep.subr.bf16.mxu0 0
        %1707 = vmatpush1.bf16.msra.mxu0 0
        %1708 = vmatprep.subr.bf16.mxu0 0
        %1709 = vmatpush1.bf16.msra.mxu0 0
        %1710 = vmatprep.mubr.bf16.mxu0 0
        %1711 = vmatmul.mubr.bf16.gmra.mrb[0].mxu0 %v1627
        %v1712 = vpop.f32.mrb[0].mxu0
        %v1713 = vadd.f32 0.0, %v1712
        %v1714 = vpop.f32.mrb[0].mxu0
        %v1715 = vpop.f32.mrb[0].mxu0
        %v1716 = vadd.f32 0.0, %v1715
        %v1717 = vpop.f32.mrb[0].mxu0
        %1718 = vmatprep.mubr.bf16.mxu0 0
        %1719 = vmatmul.mubr.bf16.gmra.mrb[0].mxu0 %v1630
        %v1720 = vpop.f32.mrb[0].mxu0
        %v1721 = vadd.f32 0.0, %v1720
        %v1722 = vpop.f32.mrb[0].mxu0
        %v1723 = vpop.f32.mrb[0].mxu0
        %v1724 = vadd.f32 0.0, %v1723
        %v1725 = vpop.f32.mrb[0].mxu0
        %1726 = vmatprep.mubr.bf16.mxu0 0
        %1727 = vmatmul.mubr.bf16.gmra.mrb[0].mxu0 %v1633
        %v1728 = vpop.f32.mrb[0].mxu0
        %v1729 = vadd.f32 0.0, %v1728
        %v1730 = vpop.f32.mrb[0].mxu0
        %v1731 = vpop.f32.mrb[0].mxu0
        %v1732 = vadd.f32 0.0, %v1731
        %v1733 = vpop.f32.mrb[0].mxu0
        %1734 = vmatprep.mubr.bf16.mxu0 0
        %1735 = vmatmul.mubr.bf16.gmra.mrb[0].mxu0 %v1636
        %v1736 = vpop.f32.mrb[0].mxu0
        %v1737 = vadd.f32 0.0, %v1736
        %v1738 = vpop.f32.mrb[0].mxu0
        %v1739 = vpop.f32.mrb[0].mxu0
        %v1740 = vadd.f32 0.0, %v1739
        %v1741 = vpop.f32.mrb[0].mxu0
        %1742 = vmatprep.mubr.bf16.mxu0 0
        %1743 = vmatmul.mubr.bf16.gmra.mrb[0].mxu0 %v1639
        %v1744 = vpop.f32.mrb[0].mxu0
        %v1745 = vadd.f32 0.0, %v1744
        %v1746 = vpop.f32.mrb[0].mxu0
        %v1747 = vpop.f32.mrb[0].mxu0
        %v1748 = vadd.f32 0.0, %v1747
        %v1749 = vpop.f32.mrb[0].mxu0
        %1750 = vmatprep.mubr.bf16.mxu0 0
        %1751 = vmatmul.mubr.bf16.gmra.mrb[0].mxu0 %v1642
        %v1752 = vpop.f32.mrb[0].mxu0
        %v1753 = vadd.f32 0.0, %v1752
        %v1754 = vpop.f32.mrb[0].mxu0
        %v1755 = vpop.f32.mrb[0].mxu0
        %v1756 = vadd.f32 0.0, %v1755
        %v1757 = vpop.f32.mrb[0].mxu0
        %1758 = vmatprep.mubr.bf16.mxu0 0
        %1759 = vmatmul.mubr.bf16.gmra.mrb[0].mxu0 %v1645
        %v1760 = vpop.f32.mrb[0].mxu0
        %v1761 = vadd.f32 0.0, %v1760
        %v1762 = vpop.f32.mrb[0].mxu0
        %v1763 = vpop.f32.mrb[0].mxu0
        %v1764 = vadd.f32 0.0, %v1763
        %v1765 = vpop.f32.mrb[0].mxu0
        %1766 = vmatprep.mubr.bf16.mxu0 0
        %1767 = vmatmul.mubr.bf16.gmra.mrb[0].mxu0 %v1648
        %v1768 = vpop.f32.mrb[0].mxu0
        %v1769 = vadd.f32 0.0, %v1768
        %v1770 = vpop.f32.mrb[0].mxu0
        %v1771 = vpop.f32.mrb[0].mxu0
        %v1772 = vadd.f32 0.0, %v1771
        %v1773 = vpop.f32.mrb[0].mxu0
        %1774 = vmatprep.mubr.bf16.mxu0 0
        %1775 = vmatmul.mubr.bf16.gmra.mrb[0].mxu0 %v1651
        %v1776 = vpop.f32.mrb[0].mxu0
        %v1777 = vadd.f32 0.0, %v1776
        %v1778 = vpop.f32.mrb[0].mxu0
        %v1779 = vpop.f32.mrb[0].mxu0
        %v1780 = vadd.f32 0.0, %v1779
        %v1781 = vpop.f32.mrb[0].mxu0
        %1782 = vmatprep.mubr.bf16.mxu0 0
        %1783 = vmatmul.mubr.bf16.gmra.mrb[0].mxu0 %v1654
        %v1784 = vpop.f32.mrb[0].mxu0
        %v1785 = vadd.f32 0.0, %v1784
        %v1786 = vpop.f32.mrb[0].mxu0
        %v1787 = vpop.f32.mrb[0].mxu0
        %v1788 = vadd.f32 0.0, %v1787
        %v1789 = vpop.f32.mrb[0].mxu0
        %1790 = vmatprep.mubr.bf16.mxu0 0
        %1791 = vmatmul.mubr.bf16.gmra.mrb[0].mxu0 %v1657
        %v1792 = vpop.f32.mrb[0].mxu0
        %v1793 = vadd.f32 0.0, %v1792
        %v1794 = vpop.f32.mrb[0].mxu0
        %v1795 = vpop.f32.mrb[0].mxu0
        %v1796 = vadd.f32 0.0, %v1795
        %v1797 = vpop.f32.mrb[0].mxu0
        %1798 = vmatprep.mubr.bf16.mxu0 0
        %1799 = vmatmul.mubr.bf16.gmra.mrb[0].mxu0 %v1660
        %v1800 = vpop.f32.mrb[0].mxu0
        %v1801 = vadd.f32 0.0, %v1800
        %v1802 = vpop.f32.mrb[0].mxu0
        %v1803 = vpop.f32.mrb[0].mxu0
        %v1804 = vadd.f32 0.0, %v1803
        %v1805 = vpop.f32.mrb[0].mxu0
        %1806 = vmatprep.mubr.bf16.mxu0 0
        %1807 = vmatmul.mubr.bf16.gmra.mrb[0].mxu0 %v1663
        %v1808 = vpop.f32.mrb[0].mxu0
        %v1809 = vadd.f32 0.0, %v1808
        %v1810 = vpop.f32.mrb[0].mxu0
        %v1811 = vpop.f32.mrb[0].mxu0
        %v1812 = vadd.f32 0.0, %v1811
        %v1813 = vpop.f32.mrb[0].mxu0
        %1814 = vmatprep.mubr.bf16.mxu0 0
        %1815 = vmatmul.mubr.bf16.gmra.mrb[0].mxu0 %v1666
        %v1816 = vpop.f32.mrb[0].mxu0
        %v1817 = vadd.f32 0.0, %v1816
        %v1818 = vpop.f32.mrb[0].mxu0
        %v1819 = vpop.f32.mrb[0].mxu0
        %v1820 = vadd.f32 0.0, %v1819
        %v1821 = vpop.f32.mrb[0].mxu0
        %1822 = vmatprep.mubr.bf16.mxu0 0
        %1823 = vmatmul.mubr.bf16.gmra.mrb[0].mxu0 %v1669
        %v1824 = vpop.f32.mrb[0].mxu0
        %v1825 = vadd.f32 0.0, %v1824
        %v1826 = vpop.f32.mrb[0].mxu0
        %v1827 = vpop.f32.mrb[0].mxu0
        %v1828 = vadd.f32 0.0, %v1827
        %v1829 = vpop.f32.mrb[0].mxu0
        %1830 = vmatprep.mubr.bf16.mxu0 0
        %1831 = vmatmul.mubr.bf16.gmra.mrb[0].mxu0 %v1672
        %v1832 = vpop.f32.mrb[0].mxu0
        %v1833 = vadd.f32 0.0, %v1832
        %v1834 = vpop.f32.mrb[0].mxu0
        %v1835 = vpop.f32.mrb[0].mxu0
        %v1836 = vadd.f32 0.0, %v1835
        %v1837 = vpop.f32.mrb[0].mxu0
        %1838 = vdwg.mxu0
        %1839 = vst [vmem:[%s194] sm:$0xff] %v1713
        %1840 = vst [vmem:[%s194 + $0x8] sm:$0xff] %v1716
        %1841 = vst [vmem:[%s194 + $0x10] sm:$0xff] %v1721
        %1842 = vst [vmem:[%s194 + $0x18] sm:$0xff] %v1724
        %1843 = vst [vmem:[%s194 + $0x20] sm:$0xff] %v1729
        %1844 = vst [vmem:[%s194 + $0x28] sm:$0xff] %v1732
        %1845 = vst [vmem:[%s194 + $0x30] sm:$0xff] %v1737
        %1846 = vst [vmem:[%s194 + $0x38] sm:$0xff] %v1740
        %1847 = vst [vmem:[%s194 + $0x40] sm:$0xff] %v1745
        %1848 = vst [vmem:[%s194 + $0x48] sm:$0xff] %v1748
        %1849 = vst [vmem:[%s194 + $0x50] sm:$0xff] %v1753
        %1850 = vst [vmem:[%s194 + $0x58] sm:$0xff] %v1756
        %1851 = vst [vmem:[%s194 + $0x60] sm:$0xff] %v1761
        %1852 = vst [vmem:[%s194 + $0x68] sm:$0xff] %v1764
        %1853 = vst [vmem:[%s194 + $0x70] sm:$0xff] %v1769
        %1854 = vst [vmem:[%s194 + $0x78] sm:$0xff] %v1772
        %1855 = vst [vmem:[%s194 + $0x80] sm:$0xff] %v1777
        %1856 = vst [vmem:[%s194 + $0x88] sm:$0xff] %v1780
        %1857 = vst [vmem:[%s194 + $0x90] sm:$0xff] %v1785
        %1858 = vst [vmem:[%s194 + $0x98] sm:$0xff] %v1788
        %1859 = vst [vmem:[%s194 + $0xa0] sm:$0xff] %v1793
        %1860 = vst [vmem:[%s194 + $0xa8] sm:$0xff] %v1796
        %1861 = vst [vmem:[%s194 + $0xb0] sm:$0xff] %v1801
        %1862 = vst [vmem:[%s194 + $0xb8] sm:$0xff] %v1804
        %1863 = vst [vmem:[%s194 + $0xc0] sm:$0xff] %v1809
        %1864 = vst [vmem:[%s194 + $0xc8] sm:$0xff] %v1812
        %1865 = vst [vmem:[%s194 + $0xd0] sm:$0xff] %v1817
        %1866 = vst [vmem:[%s194 + $0xd8] sm:$0xff] %v1820
        %1867 = vst [vmem:[%s194 + $0xe0] sm:$0xff] %v1825
        %1868 = vst [vmem:[%s194 + $0xe8] sm:$0xff] %v1828
        %1869 = vst [vmem:[%s194 + $0xf0] sm:$0xff] %v1833
        %1870 = vst [vmem:[%s194 + $0xf8] sm:$0xff] %v1836
        %v1871 = vadd.f32 %v1713, %v1716
        %v1872 = vadd.f32 %v1871, %v1721
        %v1873 = vadd.f32 %v1872, %v1724
        %v1874 = vadd.f32 %v1873, %v1729
        %v1875 = vadd.f32 %v1874, %v1732
        %v1876 = vadd.f32 %v1875, %v1737
        %v1877 = vadd.f32 %v1876, %v1740
        %v1878 = vadd.f32 %v1877, %v1745
        %v1879 = vadd.f32 %v1878, %v1748
        %v1880 = vadd.f32 %v1879, %v1753
        %v1881 = vadd.f32 %v1880, %v1756
        %v1882 = vadd.f32 %v1881, %v1761
        %v1883 = vadd.f32 %v1882, %v1764
        %v1884 = vadd.f32 %v1883, %v1769
        %v1885 = vadd.f32 %v1884, %v1772
        %v1886 = vadd.f32 %v1885, %v1777
        %v1887 = vadd.f32 %v1886, %v1780
        %v1888 = vadd.f32 %v1887, %v1785
        %v1889 = vadd.f32 %v1888, %v1788
        %v1890 = vadd.f32 %v1889, %v1793
        %v1891 = vadd.f32 %v1890, %v1796
        %v1892 = vadd.f32 %v1891, %v1801
        %v1893 = vadd.f32 %v1892, %v1804
        %v1894 = vadd.f32 %v1893, %v1809
        %v1895 = vadd.f32 %v1894, %v1812
        %v1896 = vadd.f32 %v1895, %v1817
        %v1897 = vadd.f32 %v1896, %v1820
        %v1898 = vadd.f32 %v1897, %v1825
        %v1899 = vadd.f32 %v1898, %v1828
        %v1900 = vadd.f32 %v1899, %v1833
        %v1901 = vadd.f32 %v1900, %v1836
        %v1902 = vrot.slane %v1901, 4
        %v1903 = vadd.f32 %v1901, %v1902
        %v1904 = vrot.slane %v1903, 2
        %v1905 = vadd.f32 %v1903, %v1904
        %v1906 = vrot.slane %v1905, 1
        %v1907 = vadd.f32 %v1905, %v1906
        %1908 = vst [vmem:[%s200] sm:$0x1] %v1907
        %v1909 = vmul.f32 %v1713, %v1713
        %v1910 = vmul.f32 %v1716, %v1716
        %v1911 = vmul.f32 %v1721, %v1721
        %v1912 = vmul.f32 %v1724, %v1724
        %v1913 = vmul.f32 %v1729, %v1729
        %v1914 = vmul.f32 %v1732, %v1732
        %v1915 = vmul.f32 %v1737, %v1737
        %v1916 = vmul.f32 %v1740, %v1740
        %v1917 = vmul.f32 %v1745, %v1745
        %v1918 = vmul.f32 %v1748, %v1748
        %v1919 = vmul.f32 %v1753, %v1753
        %v1920 = vmul.f32 %v1756, %v1756
        %v1921 = vmul.f32 %v1761, %v1761
        %v1922 = vmul.f32 %v1764, %v1764
        %v1923 = vmul.f32 %v1769, %v1769
        %v1924 = vmul.f32 %v1772, %v1772
        %v1925 = vmul.f32 %v1777, %v1777
        %v1926 = vmul.f32 %v1780, %v1780
        %v1927 = vmul.f32 %v1785, %v1785
        %v1928 = vmul.f32 %v1788, %v1788
        %v1929 = vmul.f32 %v1793, %v1793
        %v1930 = vmul.f32 %v1796, %v1796
        %v1931 = vmul.f32 %v1801, %v1801
        %v1932 = vmul.f32 %v1804, %v1804
        %v1933 = vmul.f32 %v1809, %v1809
        %v1934 = vmul.f32 %v1812, %v1812
        %v1935 = vmul.f32 %v1817, %v1817
        %v1936 = vmul.f32 %v1820, %v1820
        %v1937 = vmul.f32 %v1825, %v1825
        %v1938 = vmul.f32 %v1828, %v1828
        %v1939 = vmul.f32 %v1833, %v1833
        %v1940 = vmul.f32 %v1836, %v1836
        %v1941 = vadd.f32 %v1909, %v1910
        %v1942 = vadd.f32 %v1941, %v1911
        %v1943 = vadd.f32 %v1942, %v1912
        %v1944 = vadd.f32 %v1943, %v1913
        %v1945 = vadd.f32 %v1944, %v1914
        %v1946 = vadd.f32 %v1945, %v1915
        %v1947 = vadd.f32 %v1946, %v1916
        %v1948 = vadd.f32 %v1947, %v1917
        %v1949 = vadd.f32 %v1948, %v1918
        %v1950 = vadd.f32 %v1949, %v1919
        %v1951 = vadd.f32 %v1950, %v1920
        %v1952 = vadd.f32 %v1951, %v1921
        %v1953 = vadd.f32 %v1952, %v1922
        %v1954 = vadd.f32 %v1953, %v1923
        %v1955 = vadd.f32 %v1954, %v1924
        %v1956 = vadd.f32 %v1955, %v1925
        %v1957 = vadd.f32 %v1956, %v1926
        %v1958 = vadd.f32 %v1957, %v1927
        %v1959 = vadd.f32 %v1958, %v1928
        %v1960 = vadd.f32 %v1959, %v1929
        %v1961 = vadd.f32 %v1960, %v1930
        %v1962 = vadd.f32 %v1961, %v1931
        %v1963 = vadd.f32 %v1962, %v1932
        %v1964 = vadd.f32 %v1963, %v1933
        %v1965 = vadd.f32 %v1964, %v1934
        %v1966 = vadd.f32 %v1965, %v1935
        %v1967 = vadd.f32 %v1966, %v1936
        %v1968 = vadd.f32 %v1967, %v1937
        %v1969 = vadd.f32 %v1968, %v1938
        %v1970 = vadd.f32 %v1969, %v1939
        %v1971 = vadd.f32 %v1970, %v1940
        %v1972 = vrot.slane %v1971, 4
        %v1973 = vadd.f32 %v1971, %v1972
        %v1974 = vrot.slane %v1973, 2
        %v1975 = vadd.f32 %v1973, %v1974
        %v1976 = vrot.slane %v1975, 1
        %v1977 = vadd.f32 %v1975, %v1976
        %1978 = vst [vmem:[%s206] sm:$0x1] %v1977
        %s1979 = sand.u32 %s77, 1
        %s1980 = scalar_lea.sflag [#allocation3], %s1979
        %s1981 = sand.u32 %s77, 1
        %s1982 = smul.addr %s1981, 256
        %s1983 = scalar_lea.vmem [#allocation2], %s1982
        %s1984 = sand.u32 %s22, 1
        %s1985 = scalar_lea.sflag [#allocation5], %s1984
        %s1986 = sand.u32 %s103, 1
        %s1987 = scalar_lea.vmem [#allocation4], %s1986
        %s1988 = sand.u32 %s22, 1
        %s1989 = scalar_lea.sflag [#allocation5], %s1988
        %s1990 = sand.u32 %s129, 1
        %s1991 = scalar_lea.vmem [#allocation6], %s1990
        // Predicated region
        $region29: #{tpu_custom_call.1} parent=27 // pred_check
          %p1992 = pneg %p87
        $region30: #{tpu_custom_call.1} parent=27 // pred_check_branch
          %1994 = sbr.rel (%p1992) target = $region32
        $region31: #{tpu_custom_call.1} parent=27 // pred_region
          %s1996 = ssub.s32 4096, 4096
          %1997 = vsyncadd %s1980, %s1996
          %s1998 = smul.addr %s22, 32
          %s1999 = smul.addr %s1998, 128
          %s2000 = scalar_lea.hbm %s2, %s1999
          %s2001 = sshll.u32 %s1983, 4
          %s2002 = int_to_ptr.vmem [resolvable:$true] %s2001
          %2007 = dma.vmem_to_hbm [thread:$0]  %s2002, 4096, %s2000, %s1980, 128, 128, 8
        $region32: #{tpu_custom_call.1} parent=27 // pred_fallthru
          _
        // Predicated region
        $region33: #{tpu_custom_call.1} parent=27 // pred_check
          %p2008 = pneg %p113
        $region34: #{tpu_custom_call.1} parent=27 // pred_check_branch
          %2010 = sbr.rel (%p2008) target = $region36
        $region35: #{tpu_custom_call.1} parent=27 // pred_region
          %s2012 = ssub.s32 16, 16
          %2013 = vsyncadd %s1985, %s2012
          %s2014 = smul.addr %s22, 16
          %s2015 = scalar_lea.hbm %s3, %s2014
          %s2017 = sshll.u32 %s1987, 4
          %s2018 = int_to_ptr.vmem [resolvable:$true] %s2017
          %2020 = dma.vmem_to_hbm [thread:$0]  %s2018, 16, %s2015, %s1985
        $region36: #{tpu_custom_call.1} parent=27 // pred_fallthru
          _
        // Predicated region
        $region37: #{tpu_custom_call.1} parent=27 // pred_check
          %p2021 = pneg %p139
        $region38: #{tpu_custom_call.1} parent=27 // pred_check_branch
          %2023 = sbr.rel (%p2021) target = $region40
        $region39: #{tpu_custom_call.1} parent=27 // pred_region
          %s2025 = ssub.s32 16, 16
          %2026 = vsyncadd %s1989, %s2025
          %s2027 = smul.addr %s22, 16
          %s2028 = scalar_lea.hbm %s4, %s2027
          %s2030 = sshll.u32 %s1991, 4
          %s2031 = int_to_ptr.vmem [resolvable:$true] %s2030
          %2033 = dma.vmem_to_hbm [thread:$0]  %s2031, 16, %s2028, %s1989
        $region40: #{tpu_custom_call.1} parent=27 // pred_fallthru
          _
      $region28: #{tpu_custom_call.1} parent=5 // pred_fallthru
        _
      %p2034 = scmp.le.s32.totalorder 2, %s17
      // Predicated region
      $region41: #{tpu_custom_call.1} parent=5 // pred_check
        %p2035 = pneg %p2034
      $region42: #{tpu_custom_call.1} parent=5 // pred_check_branch
        %2037 = sbr.rel (%p2035) target = $region44
      $region43: #{tpu_custom_call.1} parent=5 // pred_region
        %s2038 = ssub.s32 %s17, 2
        // Predicated region
        $region45: #{tpu_custom_call.1} parent=43 // pred_check
          %p2039 = pneg %p93
        $region46: #{tpu_custom_call.1} parent=43 // pred_check_branch
          %2041 = sbr.rel (%p2039) target = $region48
        $region47: #{tpu_custom_call.1} parent=43 // pred_region
          %s2042 = sand.u32 %s78, 1
          %s2043 = scalar_lea.sflag [#allocation3], %s2042
          %s2044 = sand.u32 %s78, 1
          %s2045 = smul.addr %s2044, 256
          %s2046 = scalar_lea.vmem [#allocation2], %s2045
          %2047 = dma.done %s2043, 4096
        $region48: #{tpu_custom_call.1} parent=43 // pred_fallthru
          _
        // Predicated region
        $region49: #{tpu_custom_call.1} parent=43 // pred_check
          %p2048 = pneg %p119
        $region50: #{tpu_custom_call.1} parent=43 // pred_check_branch
          %2050 = sbr.rel (%p2048) target = $region52
        $region51: #{tpu_custom_call.1} parent=43 // pred_region
          %s2051 = sand.u32 %s23, 1
          %s2052 = scalar_lea.sflag [#allocation5], %s2051
          %s2053 = sand.u32 %s104, 1
          %s2054 = scalar_lea.vmem [#allocation4], %s2053
          %2055 = dma.done %s2052, 16
        $region52: #{tpu_custom_call.1} parent=43 // pred_fallthru
          _
        // Predicated region
        $region53: #{tpu_custom_call.1} parent=43 // pred_check
          %p2056 = pneg %p145
        $region54: #{tpu_custom_call.1} parent=43 // pred_check_branch
          %2058 = sbr.rel (%p2056) target = $region56
        $region55: #{tpu_custom_call.1} parent=43 // pred_region
          %s2059 = sand.u32 %s23, 1
          %s2060 = scalar_lea.sflag [#allocation5], %s2059
          %s2061 = sand.u32 %s130, 1
          %s2062 = scalar_lea.vmem [#allocation6], %s2061
          %2063 = dma.done %s2060, 16
        $region56: #{tpu_custom_call.1} parent=43 // pred_fallthru
          _
      $region44: #{tpu_custom_call.1} parent=5 // pred_fallthru
        _
    $region6: #{tpu_custom_call.1} parent=1 // loop_footer
      %s21 = sadd.s32 1, %s17
    $region7: #{tpu_custom_call.1} parent=1 // loop_footer_branch
      %16 = sbr.rel target = $region3
    $region8: #{tpu_custom_call.1} parent=1 // loop_exit
      _
    %2064 = vsyncpa [#allocation3], 1
    %s2065 = scalar_lea.sflag [#allocation3], 1
    %2066 = vsyncpa %s2065, 1
    %2067 = vsyncpa [#allocation5], 1
    %s2068 = scalar_lea.sflag [#allocation5], 1
    %2069 = vsyncpa %s2068, 1

</llo_original>
